<compile_context>
chip_gen: v7x
topology: tpu7x:2x2x1
jax: 0.10.0
libtpu: 0.0.40
codegen_flags: <defaults>
</compile_context>

<pallas_src>
import jax
import jax.numpy as jnp
import numpy as np
from jax.experimental import pallas as pl
from jax.experimental.pallas import tpu as pltpu

MODEL_SIZE = 32   # H
EMB_IN     = 16
SEQ_LEN    = 8    # T
BATCH      = 2    # B
MAXLEN     = 10   # unused in the inputs-provided branch
# TODO(synk): the `inputs is falsy` autoregressive branch depends on an undefined
# external `Token.start`; only the teacher-forcing branch is implemented.


def _gru_cell(x, h, w_ih, w_hh, b_ih, b_hh, H):
    """PyTorch GRUCell math (used only by the pure-JAX reference)."""
    gi = jnp.dot(x, w_ih) + b_ih
    gh = jnp.dot(h, w_hh) + b_hh
    i_r, i_z, i_n = gi[:, :H], gi[:, H:2 * H], gi[:, 2 * H:]
    h_r, h_z, h_n = gh[:, :H], gh[:, H:2 * H], gh[:, 2 * H:]
    r = jax.nn.sigmoid(i_r + h_r)
    z = jax.nn.sigmoid(i_z + h_z)
    n = jnp.tanh(i_n + r * h_n)
    return (1.0 - z) * n + z * h


def rnn_decoder_kernel(x_ref, h0_ref,
                       wgi0_ref, bgi0_ref,     # embed ∘ W_ih0  : (16, 3H), (1, 3H)
                       whh0_ref, bhh0_ref,     # layer-0 hh     : (H, 3H),  (1, 3H)
                       w1_ref,   b1_ref,       # layer-1 fused  : (2H, 4H), (1, 4H)
                       wfc_ref,  bfc_ref,      # fc             : (H, 16),  (1, 16)
                       logits_ref, hidden_ref):
    H = MODEL_SIZE
    T, B, _ = x_ref.shape

    # --- Prologue: input-side layer-0 gate pre-activations for all timesteps at once.
    x_all = x_ref[...].reshape(T * B, EMB_IN).astype(jnp.float32)
    gi0_all = (jnp.dot(x_all, wgi0_ref[...], preferred_element_type=jnp.float32)
               + bgi0_ref[...]).reshape(T, B, 3 * H)

    # --- Hoisted weight loads / bias broadcasts (outside the time loop).
    whh0 = whh0_ref[...]
    w1   = w1_ref[...]
    b1   = b1_ref[...]
    bhh0  = jnp.broadcast_to(bhh0_ref[...], (B, 3 * H))
    b_rz1 = jnp.broadcast_to(b1[:, :2 * H], (B, 2 * H))
    b_in1 = jnp.broadcast_to(b1[:, 2 * H:3 * H], (B, H))
    b_hn1 = jnp.broadcast_to(b1[:, 3 * H:], (B, H))

    # --- Recurrence: hidden state carried in registers; fully unrolled over T.
    h0 = h0_ref[0].astype(jnp.float32)
    h1 = h0_ref[1].astype(jnp.float32)
    h1_steps = []
    for t in range(T):                          # T is static -> fully unrolled
        # layer 0: gi precomputed; only the h-dependent matmul is on the serial path
        gi0 = gi0_all[t]                                            # (B, 3H)
        gh0 = jnp.dot(h0, whh0, preferred_element_type=jnp.float32) + bhh0
        r0 = jax.nn.sigmoid(gi0[:, :H] + gh0[:, :H])
        z0 = jax.nn.sigmoid(gi0[:, H:2 * H] + gh0[:, H:2 * H])
        n0 = jnp.tanh(gi0[:, 2 * H:] + r0 * gh0[:, 2 * H:])
        h0 = (1.0 - z0) * n0 + z0 * h0

        # layer 1: single fused (B,2H)x(2H,4H) matmul -> [ r|z | i_n | h_n ]
        g1 = jnp.dot(jnp.concatenate([h0, h1], axis=1), w1,
                     preferred_element_type=jnp.float32)            # (B, 4H)
        rz1 = jax.nn.sigmoid(g1[:, :2 * H] + b_rz1)
        r1, z1 = rz1[:, :H], rz1[:, H:]
        n1 = jnp.tanh(g1[:, 2 * H:3 * H] + b_in1 + r1 * (g1[:, 3 * H:] + b_hn1))
        h1 = (1.0 - z1) * n1 + z1 * h1
        h1_steps.append(h1)

    # --- Epilogue: final hidden state + one deferred fc matmul over all timesteps.
    hidden_ref[0] = h0.astype(hidden_ref.dtype)
    hidden_ref[1] = h1.astype(hidden_ref.dtype)

    h1_all = jnp.concatenate(h1_steps, axis=0)                      # (T*B, H)
    logits = jnp.dot(h1_all, wfc_ref[...],
                     preferred_element_type=jnp.float32) + bfc_ref[...]
    logits_ref[...] = logits.reshape(T, B, EMB_IN).astype(logits_ref.dtype)


def _fuse_params(p, H):
    """Pre-compose weights so the recurrent loop carries only 2 matmuls/step."""
    # embed Linear folded into layer-0 input-side gates:
    #   gi0 = (x @ W_emb^T + b_emb) @ W_ih0^T + b_ih0
    #       = x @ (W_emb^T @ W_ih0^T) + (b_emb @ W_ih0^T + b_ih0)
    wgi0 = p["w_emb_t"] @ p["wih0_t"]                       # (16, 3H)
    bgi0 = p["b_emb"] @ p["wih0_t"] + p["bih0"]             # (1, 3H)

    # layer 1: stack [W_ih1; W_hh1] into one (2H, 4H) operand laid out as
    #   cols [0:2H]  -> r,z (ih + hh contributions summed by the matmul)
    #   cols [2H:3H] -> i_n (from x = h0 only)
    #   cols [3H:4H] -> h_n (from h1 only; must stay separate for r*(h_n+b_hhn))
    z = jnp.zeros((H, H), jnp.float32)
    top = jnp.concatenate([p["wih1_t"][:, :2 * H], p["wih1_t"][:, 2 * H:], z], axis=1)
    bot = jnp.concatenate([p["whh1_t"][:, :2 * H], z, p["whh1_t"][:, 2 * H:]], axis=1)
    w1 = jnp.concatenate([top, bot], axis=0)                # (2H, 4H)
    b1 = jnp.concatenate([p["bih1"][:, :2 * H] + p["bhh1"][:, :2 * H],
                          p["bih1"][:, 2 * H:], p["bhh1"][:, 2 * H:]], axis=1)  # (1, 4H)
    return wgi0, bgi0, w1, b1


def rnn_decoder_forward(inputs, state, params):
    """inputs: (T, B, 16), state: (2, B, H) -> (logits (T*B,16), hidden (2,B,H))."""
    T, B, _ = inputs.shape
    H = MODEL_SIZE
    Bp = ((B + 7) // 8) * 8            # pad batch (sublane) dim up to a multiple of 8

    wgi0, bgi0, w1, b1 = _fuse_params(params, H)

    inputs_p = jnp.zeros((T, Bp, EMB_IN), jnp.float32).at[:, :B].set(inputs)
    state_p  = jnp.zeros((2, Bp, H), jnp.float32).at[:, :B].set(state)

    full = lambda shape: pl.BlockSpec(shape, lambda i: tuple(0 for _ in shape))

    in_specs = [
        full((T, Bp, EMB_IN)),                     # inputs (whole sequence resident)
        full((2, Bp, H)),                          # initial state
        full((EMB_IN, 3 * H)), full((1, 3 * H)),   # fused embed∘W_ih0
        full((H, 3 * H)), full((1, 3 * H)),        # layer-0 hh
        full((2 * H, 4 * H)), full((1, 4 * H)),    # layer-1 fused [ih;hh]
        full((H, EMB_IN)), full((1, EMB_IN)),      # fc
    ]
    out_specs = [full((T, Bp, EMB_IN)), full((2, Bp, H))]

    logits_p, hidden_p = pl.pallas_call(
        rnn_decoder_kernel,
        out_shape=(jax.ShapeDtypeStruct((T, Bp, EMB_IN), jnp.float32),
                   jax.ShapeDtypeStruct((2, Bp, H), jnp.float32)),
        grid_spec=pltpu.PrefetchScalarGridSpec(
            num_scalar_prefetch=0,
            grid=(1,),                             # single step: no pipeline overhead
            in_specs=in_specs,
            out_specs=out_specs,
        ),
        compiler_params=pltpu.CompilerParams(
            dimension_semantics=("arbitrary",)),
    )(inputs_p, state_p, wgi0, bgi0,
      params["whh0_t"], params["bhh0"], w1, b1,
      params["wfc_t"], params["bfc"])

    logits = logits_p[:, :B, :].reshape(T * B, EMB_IN)   # matches outputs.view(-1, H) -> fc
    hidden = hidden_p[:, :B, :]
    return logits, hidden


def _make_params(key, H):
    """Deterministic PyTorch-style uniform(-1/sqrt(fan_in)) init; weights pre-transposed."""
    ks = jax.random.split(key, 12)
    u = lambda k, shape, fan: jax.random.uniform(
        k, shape, jnp.float32, -1.0 / np.sqrt(fan), 1.0 / np.sqrt(fan))
    return {
        # embed: Linear(16 -> H): weight (H,16) -> transposed (16,H)
        "w_emb_t": u(ks[0], (EMB_IN, H), EMB_IN),
        "b_emb":   u(ks[1], (1, H), EMB_IN),
        # GRU layer 0
        "wih0_t": u(ks[2], (H, 3 * H), H),
        "whh0_t": u(ks[3], (H, 3 * H), H),
        "bih0":   u(ks[4], (1, 3 * H), H),
        "bhh0":   u(ks[5], (1, 3 * H), H),
        # GRU layer 1
        "wih1_t": u(ks[6], (H, 3 * H), H),
        "whh1_t": u(ks[7], (H, 3 * H), H),
        "bih1":   u(ks[8], (1, 3 * H), H),
        "bhh1":   u(ks[9], (1, 3 * H), H),
        # fc: Linear(H -> 16)
        "wfc_t": u(ks[10], (H, EMB_IN), H),
        "bfc":   u(ks[11], (1, EMB_IN), H),
    }


def _reference_forward(inputs, state, p):
    """Pure-JAX reference of the same math (non-fused weights), for verification."""
    H = MODEL_SIZE
    T, B, _ = inputs.shape
    h0, h1 = state[0], state[1]
    logits = []
    for t in range(T):
        emb = inputs[t] @ p["w_emb_t"] + p["b_emb"]
        h0 = _gru_cell(emb, h0, p["wih0_t"], p["whh0_t"], p["bih0"], p["bhh0"], H)
        h1 = _gru_cell(h0, h1, p["wih1_t"], p["whh1_t"], p["bih1"], p["bhh1"], H)
        logits.append(h1 @ p["wfc_t"] + p["bfc"])
    return jnp.stack(logits).reshape(T * B, EMB_IN), jnp.stack([h0, h1])


if __name__ == "__main__":
    key = jax.random.PRNGKey(0)
    k_in, k_state, k_params = jax.random.split(key, 3)

    inputs = jax.random.normal(k_in, (SEQ_LEN, BATCH, EMB_IN), jnp.float32)
    state = jax.random.normal(k_state, (2, BATCH, MODEL_SIZE), jnp.float32)
    params = _make_params(k_params, MODEL_SIZE)

    fwd = jax.jit(rnn_decoder_forward)
    logits, hidden = fwd(inputs, state, params)
    jax.block_until_ready((logits, hidden))

    ref_logits, ref_hidden = _reference_forward(inputs, state, params)
    np.testing.assert_allclose(np.asarray(logits), np.asarray(ref_logits), rtol=1e-4, atol=1e-5)
    np.testing.assert_allclose(np.asarray(hidden), np.asarray(ref_hidden), rtol=1e-4, atol=1e-5)

    assert logits.shape == (SEQ_LEN * BATCH, EMB_IN)
    assert hidden.shape == (2, BATCH, MODEL_SIZE)
    print("KERNEL_OK")
</pallas_src>

<mosaic_0001>
module attributes {stable_mosaic.version = 11 : i64} {
  func.func @rnn_decoder_kernel(%arg0: i32, %arg1: memref<8x8x16xf32, #tpu.memory_space<vmem>>, %arg2: memref<2x8x32xf32, #tpu.memory_space<vmem>>, %arg3: memref<16x96xf32, #tpu.memory_space<vmem>>, %arg4: memref<1x96xf32, #tpu.memory_space<vmem>>, %arg5: memref<32x96xf32, #tpu.memory_space<vmem>>, %arg6: memref<1x96xf32, #tpu.memory_space<vmem>>, %arg7: memref<64x128xf32, #tpu.memory_space<vmem>>, %arg8: memref<1x128xf32, #tpu.memory_space<vmem>>, %arg9: memref<32x16xf32, #tpu.memory_space<vmem>>, %arg10: memref<1x16xf32, #tpu.memory_space<vmem>>, %arg11: memref<8x8x16xf32, #tpu.memory_space<vmem>>, %arg12: memref<2x8x32xf32, #tpu.memory_space<vmem>>) attributes {dimension_semantics = [#tpu.dimension_semantics<arbitrary>], iteration_bounds = array<i64: 1>, scalar_prefetch = 0 : i64, scratch_operands = 0 : i64, tpu.core_type = #tpu.core_type<tc>, window_params = [{pipeline_mode = #tpu.pipeline_mode<synchronous>, transform_indices = @transform_0, window_bounds = array<i64: 8, 8, 16>}, {pipeline_mode = #tpu.pipeline_mode<synchronous>, transform_indices = @transform_1, window_bounds = array<i64: 2, 8, 32>}, {pipeline_mode = #tpu.pipeline_mode<synchronous>, transform_indices = @transform_2, window_bounds = array<i64: 16, 96>}, {pipeline_mode = #tpu.pipeline_mode<synchronous>, transform_indices = @transform_3, window_bounds = array<i64: 1, 96>}, {pipeline_mode = #tpu.pipeline_mode<synchronous>, transform_indices = @transform_4, window_bounds = array<i64: 32, 96>}, {pipeline_mode = #tpu.pipeline_mode<synchronous>, transform_indices = @transform_5, window_bounds = array<i64: 1, 96>}, {pipeline_mode = #tpu.pipeline_mode<synchronous>, transform_indices = @transform_6, window_bounds = array<i64: 64, 128>}, {pipeline_mode = #tpu.pipeline_mode<synchronous>, transform_indices = @transform_7, window_bounds = array<i64: 1, 128>}, {pipeline_mode = #tpu.pipeline_mode<synchronous>, transform_indices = @transform_8, window_bounds = array<i64: 32, 16>}, {pipeline_mode = #tpu.pipeline_mode<synchronous>, transform_indices = @transform_9, window_bounds = array<i64: 1, 16>}, {pipeline_mode = #tpu.pipeline_mode<synchronous>, transform_indices = @transform_10, window_bounds = array<i64: 8, 8, 16>}, {pipeline_mode = #tpu.pipeline_mode<synchronous>, transform_indices = @transform_11, window_bounds = array<i64: 2, 8, 32>}]} {
    %c0 = arith.constant 0 : index
    %c0_0 = arith.constant 0 : index
    %c0_1 = arith.constant 0 : index
    %0 = vector.load %arg1[%c0, %c0_0, %c0_1] : memref<8x8x16xf32, #tpu.memory_space<vmem>>, vector<8x8x16xf32>
    %1 = vector.shape_cast %0 : vector<8x8x16xf32> to vector<64x16xf32>
    %c0_2 = arith.constant 0 : index
    %c0_3 = arith.constant 0 : index
    %2 = vector.load %arg3[%c0_2, %c0_3] : memref<16x96xf32, #tpu.memory_space<vmem>>, vector<16x96xf32>
    %cst = arith.constant dense<0.000000e+00> : vector<64x96xf32>
    %3 = tpu.matmul %1, %2, %cst {dimension_numbers = #tpu.dot_dimension_numbers<[1], [0], [0], [1], [0, 0, 1, 1], [], []>} : vector<64x16xf32>, vector<16x96xf32>, vector<64x96xf32> -> vector<64x96xf32>
    %c0_4 = arith.constant 0 : index
    %c0_5 = arith.constant 0 : index
    %4 = vector.load %arg4[%c0_4, %c0_5] : memref<1x96xf32, #tpu.memory_space<vmem>>, vector<1x96xf32>
    %5 = vector.broadcast %4 : vector<1x96xf32> to vector<64x96xf32>
    %6 = arith.addf %3, %5 : vector<64x96xf32>
    %7 = vector.shape_cast %6 : vector<64x96xf32> to vector<8x8x96xf32>
    %c0_6 = arith.constant 0 : index
    %c0_7 = arith.constant 0 : index
    %8 = vector.load %arg5[%c0_6, %c0_7] : memref<32x96xf32, #tpu.memory_space<vmem>>, vector<32x96xf32>
    %c0_8 = arith.constant 0 : index
    %c0_9 = arith.constant 0 : index
    %9 = vector.load %arg7[%c0_8, %c0_9] : memref<64x128xf32, #tpu.memory_space<vmem>>, vector<64x128xf32>
    %c0_10 = arith.constant 0 : index
    %c0_11 = arith.constant 0 : index
    %10 = vector.load %arg8[%c0_10, %c0_11] : memref<1x128xf32, #tpu.memory_space<vmem>>, vector<1x128xf32>
    %c0_12 = arith.constant 0 : index
    %c0_13 = arith.constant 0 : index
    %11 = vector.load %arg6[%c0_12, %c0_13] : memref<1x96xf32, #tpu.memory_space<vmem>>, vector<1x96xf32>
    %12 = vector.shape_cast %11 : vector<1x96xf32> to vector<1x96xf32>
    %13 = vector.broadcast %12 : vector<1x96xf32> to vector<8x96xf32>
    %14 = vector.extract_strided_slice %10 {offsets = [0, 0], sizes = [1, 64], strides = [1, 1]} : vector<1x128xf32> to vector<1x64xf32>
    %15 = vector.shape_cast %14 : vector<1x64xf32> to vector<1x64xf32>
    %16 = vector.broadcast %15 : vector<1x64xf32> to vector<8x64xf32>
    %17 = vector.extract_strided_slice %10 {offsets = [0, 64], sizes = [1, 32], strides = [1, 1]} : vector<1x128xf32> to vector<1x32xf32>
    %18 = vector.shape_cast %17 : vector<1x32xf32> to vector<1x32xf32>
    %19 = vector.broadcast %18 : vector<1x32xf32> to vector<8x32xf32>
    %20 = vector.extract_strided_slice %10 {offsets = [0, 96], sizes = [1, 32], strides = [1, 1]} : vector<1x128xf32> to vector<1x32xf32>
    %21 = vector.shape_cast %20 : vector<1x32xf32> to vector<1x32xf32>
    %22 = vector.broadcast %21 : vector<1x32xf32> to vector<8x32xf32>
    %c0_14 = arith.constant 0 : index
    %c0_15 = arith.constant 0 : index
    %c0_16 = arith.constant 0 : index
    %23 = vector.load %arg2[%c0_14, %c0_15, %c0_16] : memref<2x8x32xf32, #tpu.memory_space<vmem>>, vector<1x8x32xf32>
    %24 = vector.shape_cast %23 : vector<1x8x32xf32> to vector<8x32xf32>
    %c1 = arith.constant 1 : index
    %c0_17 = arith.constant 0 : index
    %c0_18 = arith.constant 0 : index
    %25 = vector.load %arg2[%c1, %c0_17, %c0_18] : memref<2x8x32xf32, #tpu.memory_space<vmem>>, vector<1x8x32xf32>
    %26 = vector.shape_cast %25 : vector<1x8x32xf32> to vector<8x32xf32>
    %27 = vector.extract_strided_slice %7 {offsets = [0, 0, 0], sizes = [1, 8, 96], strides = [1, 1, 1]} : vector<8x8x96xf32> to vector<1x8x96xf32>
    %28 = vector.shape_cast %27 : vector<1x8x96xf32> to vector<8x96xf32>
    %cst_19 = arith.constant dense<0.000000e+00> : vector<8x96xf32>
    %29 = tpu.matmul %24, %8, %cst_19 {dimension_numbers = #tpu.dot_dimension_numbers<[1], [0], [0], [1], [0, 0, 1, 1], [], []>} : vector<8x32xf32>, vector<32x96xf32>, vector<8x96xf32> -> vector<8x96xf32>
    %30 = arith.addf %29, %13 : vector<8x96xf32>
    %31 = vector.extract_strided_slice %28 {offsets = [0, 0], sizes = [8, 32], strides = [1, 1]} : vector<8x96xf32> to vector<8x32xf32>
    %32 = vector.extract_strided_slice %30 {offsets = [0, 0], sizes = [8, 32], strides = [1, 1]} : vector<8x96xf32> to vector<8x32xf32>
    %33 = arith.addf %31, %32 : vector<8x32xf32>
    %34 = arith.negf %33 : vector<8x32xf32>
    %35 = math.exp %34 : vector<8x32xf32>
    %cst_20 = arith.constant 1.000000e+00 : f32
    %36 = vector.broadcast %cst_20 : f32 to vector<8x32xf32>
    %37 = arith.addf %36, %35 : vector<8x32xf32>
    %38 = arith.divf %36, %37 : vector<8x32xf32>
    %39 = vector.extract_strided_slice %28 {offsets = [0, 32], sizes = [8, 32], strides = [1, 1]} : vector<8x96xf32> to vector<8x32xf32>
    %40 = vector.extract_strided_slice %30 {offsets = [0, 32], sizes = [8, 32], strides = [1, 1]} : vector<8x96xf32> to vector<8x32xf32>
    %41 = arith.addf %39, %40 : vector<8x32xf32>
    %42 = arith.negf %41 : vector<8x32xf32>
    %43 = math.exp %42 : vector<8x32xf32>
    %cst_21 = arith.constant 1.000000e+00 : f32
    %44 = vector.broadcast %cst_21 : f32 to vector<8x32xf32>
    %45 = arith.addf %44, %43 : vector<8x32xf32>
    %46 = arith.divf %44, %45 : vector<8x32xf32>
    %47 = vector.extract_strided_slice %28 {offsets = [0, 64], sizes = [8, 32], strides = [1, 1]} : vector<8x96xf32> to vector<8x32xf32>
    %48 = vector.extract_strided_slice %30 {offsets = [0, 64], sizes = [8, 32], strides = [1, 1]} : vector<8x96xf32> to vector<8x32xf32>
    %49 = arith.mulf %38, %48 : vector<8x32xf32>
    %50 = arith.addf %47, %49 : vector<8x32xf32>
    %51 = math.tanh %50 : vector<8x32xf32>
    %cst_22 = arith.constant 1.000000e+00 : f32
    %52 = vector.broadcast %cst_22 : f32 to vector<8x32xf32>
    %53 = arith.subf %52, %46 : vector<8x32xf32>
    %54 = arith.mulf %53, %51 : vector<8x32xf32>
    %55 = arith.mulf %46, %24 : vector<8x32xf32>
    %56 = arith.addf %54, %55 : vector<8x32xf32>
    %57 = tpu.concatenate %56, %26 in 1 : vector<8x32xf32>, vector<8x32xf32> -> vector<8x64xf32>
    %cst_23 = arith.constant dense<0.000000e+00> : vector<8x128xf32>
    %58 = tpu.matmul %57, %9, %cst_23 {dimension_numbers = #tpu.dot_dimension_numbers<[1], [0], [0], [1], [0, 0, 1, 1], [], []>} : vector<8x64xf32>, vector<64x128xf32>, vector<8x128xf32> -> vector<8x128xf32>
    %59 = vector.extract_strided_slice %58 {offsets = [0, 0], sizes = [8, 64], strides = [1, 1]} : vector<8x128xf32> to vector<8x64xf32>
    %60 = arith.addf %59, %16 : vector<8x64xf32>
    %61 = arith.negf %60 : vector<8x64xf32>
    %62 = math.exp %61 : vector<8x64xf32>
    %cst_24 = arith.constant 1.000000e+00 : f32
    %63 = vector.broadcast %cst_24 : f32 to vector<8x64xf32>
    %64 = arith.addf %63, %62 : vector<8x64xf32>
    %65 = arith.divf %63, %64 : vector<8x64xf32>
    %66 = vector.extract_strided_slice %65 {offsets = [0, 0], sizes = [8, 32], strides = [1, 1]} : vector<8x64xf32> to vector<8x32xf32>
    %67 = vector.extract_strided_slice %65 {offsets = [0, 32], sizes = [8, 32], strides = [1, 1]} : vector<8x64xf32> to vector<8x32xf32>
    %68 = vector.extract_strided_slice %58 {offsets = [0, 64], sizes = [8, 32], strides = [1, 1]} : vector<8x128xf32> to vector<8x32xf32>
    %69 = arith.addf %68, %19 : vector<8x32xf32>
    %70 = vector.extract_strided_slice %58 {offsets = [0, 96], sizes = [8, 32], strides = [1, 1]} : vector<8x128xf32> to vector<8x32xf32>
    %71 = arith.addf %70, %22 : vector<8x32xf32>
    %72 = arith.mulf %66, %71 : vector<8x32xf32>
    %73 = arith.addf %69, %72 : vector<8x32xf32>
    %74 = math.tanh %73 : vector<8x32xf32>
    %cst_25 = arith.constant 1.000000e+00 : f32
    %75 = vector.broadcast %cst_25 : f32 to vector<8x32xf32>
    %76 = arith.subf %75, %67 : vector<8x32xf32>
    %77 = arith.mulf %76, %74 : vector<8x32xf32>
    %78 = arith.mulf %67, %26 : vector<8x32xf32>
    %79 = arith.addf %77, %78 : vector<8x32xf32>
    %80 = vector.extract_strided_slice %7 {offsets = [1, 0, 0], sizes = [1, 8, 96], strides = [1, 1, 1]} : vector<8x8x96xf32> to vector<1x8x96xf32>
    %81 = vector.shape_cast %80 : vector<1x8x96xf32> to vector<8x96xf32>
    %cst_26 = arith.constant dense<0.000000e+00> : vector<8x96xf32>
    %82 = tpu.matmul %56, %8, %cst_26 {dimension_numbers = #tpu.dot_dimension_numbers<[1], [0], [0], [1], [0, 0, 1, 1], [], []>} : vector<8x32xf32>, vector<32x96xf32>, vector<8x96xf32> -> vector<8x96xf32>
    %83 = arith.addf %82, %13 : vector<8x96xf32>
    %84 = vector.extract_strided_slice %81 {offsets = [0, 0], sizes = [8, 32], strides = [1, 1]} : vector<8x96xf32> to vector<8x32xf32>
    %85 = vector.extract_strided_slice %83 {offsets = [0, 0], sizes = [8, 32], strides = [1, 1]} : vector<8x96xf32> to vector<8x32xf32>
    %86 = arith.addf %84, %85 : vector<8x32xf32>
    %87 = arith.negf %86 : vector<8x32xf32>
    %88 = math.exp %87 : vector<8x32xf32>
    %cst_27 = arith.constant 1.000000e+00 : f32
    %89 = vector.broadcast %cst_27 : f32 to vector<8x32xf32>
    %90 = arith.addf %89, %88 : vector<8x32xf32>
    %91 = arith.divf %89, %90 : vector<8x32xf32>
    %92 = vector.extract_strided_slice %81 {offsets = [0, 32], sizes = [8, 32], strides = [1, 1]} : vector<8x96xf32> to vector<8x32xf32>
    %93 = vector.extract_strided_slice %83 {offsets = [0, 32], sizes = [8, 32], strides = [1, 1]} : vector<8x96xf32> to vector<8x32xf32>
    %94 = arith.addf %92, %93 : vector<8x32xf32>
    %95 = arith.negf %94 : vector<8x32xf32>
    %96 = math.exp %95 : vector<8x32xf32>
    %cst_28 = arith.constant 1.000000e+00 : f32
    %97 = vector.broadcast %cst_28 : f32 to vector<8x32xf32>
    %98 = arith.addf %97, %96 : vector<8x32xf32>
    %99 = arith.divf %97, %98 : vector<8x32xf32>
    %100 = vector.extract_strided_slice %81 {offsets = [0, 64], sizes = [8, 32], strides = [1, 1]} : vector<8x96xf32> to vector<8x32xf32>
    %101 = vector.extract_strided_slice %83 {offsets = [0, 64], sizes = [8, 32], strides = [1, 1]} : vector<8x96xf32> to vector<8x32xf32>
    %102 = arith.mulf %91, %101 : vector<8x32xf32>
    %103 = arith.addf %100, %102 : vector<8x32xf32>
    %104 = math.tanh %103 : vector<8x32xf32>
    %cst_29 = arith.constant 1.000000e+00 : f32
    %105 = vector.broadcast %cst_29 : f32 to vector<8x32xf32>
    %106 = arith.subf %105, %99 : vector<8x32xf32>
    %107 = arith.mulf %106, %104 : vector<8x32xf32>
    %108 = arith.mulf %99, %56 : vector<8x32xf32>
    %109 = arith.addf %107, %108 : vector<8x32xf32>
    %110 = tpu.concatenate %109, %79 in 1 : vector<8x32xf32>, vector<8x32xf32> -> vector<8x64xf32>
    %cst_30 = arith.constant dense<0.000000e+00> : vector<8x128xf32>
    %111 = tpu.matmul %110, %9, %cst_30 {dimension_numbers = #tpu.dot_dimension_numbers<[1], [0], [0], [1], [0, 0, 1, 1], [], []>} : vector<8x64xf32>, vector<64x128xf32>, vector<8x128xf32> -> vector<8x128xf32>
    %112 = vector.extract_strided_slice %111 {offsets = [0, 0], sizes = [8, 64], strides = [1, 1]} : vector<8x128xf32> to vector<8x64xf32>
    %113 = arith.addf %112, %16 : vector<8x64xf32>
    %114 = arith.negf %113 : vector<8x64xf32>
    %115 = math.exp %114 : vector<8x64xf32>
    %cst_31 = arith.constant 1.000000e+00 : f32
    %116 = vector.broadcast %cst_31 : f32 to vector<8x64xf32>
    %117 = arith.addf %116, %115 : vector<8x64xf32>
    %118 = arith.divf %116, %117 : vector<8x64xf32>
    %119 = vector.extract_strided_slice %118 {offsets = [0, 0], sizes = [8, 32], strides = [1, 1]} : vector<8x64xf32> to vector<8x32xf32>
    %120 = vector.extract_strided_slice %118 {offsets = [0, 32], sizes = [8, 32], strides = [1, 1]} : vector<8x64xf32> to vector<8x32xf32>
    %121 = vector.extract_strided_slice %111 {offsets = [0, 64], sizes = [8, 32], strides = [1, 1]} : vector<8x128xf32> to vector<8x32xf32>
    %122 = arith.addf %121, %19 : vector<8x32xf32>
    %123 = vector.extract_strided_slice %111 {offsets = [0, 96], sizes = [8, 32], strides = [1, 1]} : vector<8x128xf32> to vector<8x32xf32>
    %124 = arith.addf %123, %22 : vector<8x32xf32>
    %125 = arith.mulf %119, %124 : vector<8x32xf32>
    %126 = arith.addf %122, %125 : vector<8x32xf32>
    %127 = math.tanh %126 : vector<8x32xf32>
    %cst_32 = arith.constant 1.000000e+00 : f32
    %128 = vector.broadcast %cst_32 : f32 to vector<8x32xf32>
    %129 = arith.subf %128, %120 : vector<8x32xf32>
    %130 = arith.mulf %129, %127 : vector<8x32xf32>
    %131 = arith.mulf %120, %79 : vector<8x32xf32>
    %132 = arith.addf %130, %131 : vector<8x32xf32>
    %133 = vector.extract_strided_slice %7 {offsets = [2, 0, 0], sizes = [1, 8, 96], strides = [1, 1, 1]} : vector<8x8x96xf32> to vector<1x8x96xf32>
    %134 = vector.shape_cast %133 : vector<1x8x96xf32> to vector<8x96xf32>
    %cst_33 = arith.constant dense<0.000000e+00> : vector<8x96xf32>
    %135 = tpu.matmul %109, %8, %cst_33 {dimension_numbers = #tpu.dot_dimension_numbers<[1], [0], [0], [1], [0, 0, 1, 1], [], []>} : vector<8x32xf32>, vector<32x96xf32>, vector<8x96xf32> -> vector<8x96xf32>
    %136 = arith.addf %135, %13 : vector<8x96xf32>
    %137 = vector.extract_strided_slice %134 {offsets = [0, 0], sizes = [8, 32], strides = [1, 1]} : vector<8x96xf32> to vector<8x32xf32>
    %138 = vector.extract_strided_slice %136 {offsets = [0, 0], sizes = [8, 32], strides = [1, 1]} : vector<8x96xf32> to vector<8x32xf32>
    %139 = arith.addf %137, %138 : vector<8x32xf32>
    %140 = arith.negf %139 : vector<8x32xf32>
    %141 = math.exp %140 : vector<8x32xf32>
    %cst_34 = arith.constant 1.000000e+00 : f32
    %142 = vector.broadcast %cst_34 : f32 to vector<8x32xf32>
    %143 = arith.addf %142, %141 : vector<8x32xf32>
    %144 = arith.divf %142, %143 : vector<8x32xf32>
    %145 = vector.extract_strided_slice %134 {offsets = [0, 32], sizes = [8, 32], strides = [1, 1]} : vector<8x96xf32> to vector<8x32xf32>
    %146 = vector.extract_strided_slice %136 {offsets = [0, 32], sizes = [8, 32], strides = [1, 1]} : vector<8x96xf32> to vector<8x32xf32>
    %147 = arith.addf %145, %146 : vector<8x32xf32>
    %148 = arith.negf %147 : vector<8x32xf32>
    %149 = math.exp %148 : vector<8x32xf32>
    %cst_35 = arith.constant 1.000000e+00 : f32
    %150 = vector.broadcast %cst_35 : f32 to vector<8x32xf32>
    %151 = arith.addf %150, %149 : vector<8x32xf32>
    %152 = arith.divf %150, %151 : vector<8x32xf32>
    %153 = vector.extract_strided_slice %134 {offsets = [0, 64], sizes = [8, 32], strides = [1, 1]} : vector<8x96xf32> to vector<8x32xf32>
    %154 = vector.extract_strided_slice %136 {offsets = [0, 64], sizes = [8, 32], strides = [1, 1]} : vector<8x96xf32> to vector<8x32xf32>
    %155 = arith.mulf %144, %154 : vector<8x32xf32>
    %156 = arith.addf %153, %155 : vector<8x32xf32>
    %157 = math.tanh %156 : vector<8x32xf32>
    %cst_36 = arith.constant 1.000000e+00 : f32
    %158 = vector.broadcast %cst_36 : f32 to vector<8x32xf32>
    %159 = arith.subf %158, %152 : vector<8x32xf32>
    %160 = arith.mulf %159, %157 : vector<8x32xf32>
    %161 = arith.mulf %152, %109 : vector<8x32xf32>
    %162 = arith.addf %160, %161 : vector<8x32xf32>
    %163 = tpu.concatenate %162, %132 in 1 : vector<8x32xf32>, vector<8x32xf32> -> vector<8x64xf32>
    %cst_37 = arith.constant dense<0.000000e+00> : vector<8x128xf32>
    %164 = tpu.matmul %163, %9, %cst_37 {dimension_numbers = #tpu.dot_dimension_numbers<[1], [0], [0], [1], [0, 0, 1, 1], [], []>} : vector<8x64xf32>, vector<64x128xf32>, vector<8x128xf32> -> vector<8x128xf32>
    %165 = vector.extract_strided_slice %164 {offsets = [0, 0], sizes = [8, 64], strides = [1, 1]} : vector<8x128xf32> to vector<8x64xf32>
    %166 = arith.addf %165, %16 : vector<8x64xf32>
    %167 = arith.negf %166 : vector<8x64xf32>
    %168 = math.exp %167 : vector<8x64xf32>
    %cst_38 = arith.constant 1.000000e+00 : f32
    %169 = vector.broadcast %cst_38 : f32 to vector<8x64xf32>
    %170 = arith.addf %169, %168 : vector<8x64xf32>
    %171 = arith.divf %169, %170 : vector<8x64xf32>
    %172 = vector.extract_strided_slice %171 {offsets = [0, 0], sizes = [8, 32], strides = [1, 1]} : vector<8x64xf32> to vector<8x32xf32>
    %173 = vector.extract_strided_slice %171 {offsets = [0, 32], sizes = [8, 32], strides = [1, 1]} : vector<8x64xf32> to vector<8x32xf32>
    %174 = vector.extract_strided_slice %164 {offsets = [0, 64], sizes = [8, 32], strides = [1, 1]} : vector<8x128xf32> to vector<8x32xf32>
    %175 = arith.addf %174, %19 : vector<8x32xf32>
    %176 = vector.extract_strided_slice %164 {offsets = [0, 96], sizes = [8, 32], strides = [1, 1]} : vector<8x128xf32> to vector<8x32xf32>
    %177 = arith.addf %176, %22 : vector<8x32xf32>
    %178 = arith.mulf %172, %177 : vector<8x32xf32>
    %179 = arith.addf %175, %178 : vector<8x32xf32>
    %180 = math.tanh %179 : vector<8x32xf32>
    %cst_39 = arith.constant 1.000000e+00 : f32
    %181 = vector.broadcast %cst_39 : f32 to vector<8x32xf32>
    %182 = arith.subf %181, %173 : vector<8x32xf32>
    %183 = arith.mulf %182, %180 : vector<8x32xf32>
    %184 = arith.mulf %173, %132 : vector<8x32xf32>
    %185 = arith.addf %183, %184 : vector<8x32xf32>
    %186 = vector.extract_strided_slice %7 {offsets = [3, 0, 0], sizes = [1, 8, 96], strides = [1, 1, 1]} : vector<8x8x96xf32> to vector<1x8x96xf32>
    %187 = vector.shape_cast %186 : vector<1x8x96xf32> to vector<8x96xf32>
    %cst_40 = arith.constant dense<0.000000e+00> : vector<8x96xf32>
    %188 = tpu.matmul %162, %8, %cst_40 {dimension_numbers = #tpu.dot_dimension_numbers<[1], [0], [0], [1], [0, 0, 1, 1], [], []>} : vector<8x32xf32>, vector<32x96xf32>, vector<8x96xf32> -> vector<8x96xf32>
    %189 = arith.addf %188, %13 : vector<8x96xf32>
    %190 = vector.extract_strided_slice %187 {offsets = [0, 0], sizes = [8, 32], strides = [1, 1]} : vector<8x96xf32> to vector<8x32xf32>
    %191 = vector.extract_strided_slice %189 {offsets = [0, 0], sizes = [8, 32], strides = [1, 1]} : vector<8x96xf32> to vector<8x32xf32>
    %192 = arith.addf %190, %191 : vector<8x32xf32>
    %193 = arith.negf %192 : vector<8x32xf32>
    %194 = math.exp %193 : vector<8x32xf32>
    %cst_41 = arith.constant 1.000000e+00 : f32
    %195 = vector.broadcast %cst_41 : f32 to vector<8x32xf32>
    %196 = arith.addf %195, %194 : vector<8x32xf32>
    %197 = arith.divf %195, %196 : vector<8x32xf32>
    %198 = vector.extract_strided_slice %187 {offsets = [0, 32], sizes = [8, 32], strides = [1, 1]} : vector<8x96xf32> to vector<8x32xf32>
    %199 = vector.extract_strided_slice %189 {offsets = [0, 32], sizes = [8, 32], strides = [1, 1]} : vector<8x96xf32> to vector<8x32xf32>
    %200 = arith.addf %198, %199 : vector<8x32xf32>
    %201 = arith.negf %200 : vector<8x32xf32>
    %202 = math.exp %201 : vector<8x32xf32>
    %cst_42 = arith.constant 1.000000e+00 : f32
    %203 = vector.broadcast %cst_42 : f32 to vector<8x32xf32>
    %204 = arith.addf %203, %202 : vector<8x32xf32>
    %205 = arith.divf %203, %204 : vector<8x32xf32>
    %206 = vector.extract_strided_slice %187 {offsets = [0, 64], sizes = [8, 32], strides = [1, 1]} : vector<8x96xf32> to vector<8x32xf32>
    %207 = vector.extract_strided_slice %189 {offsets = [0, 64], sizes = [8, 32], strides = [1, 1]} : vector<8x96xf32> to vector<8x32xf32>
    %208 = arith.mulf %197, %207 : vector<8x32xf32>
    %209 = arith.addf %206, %208 : vector<8x32xf32>
    %210 = math.tanh %209 : vector<8x32xf32>
    %cst_43 = arith.constant 1.000000e+00 : f32
    %211 = vector.broadcast %cst_43 : f32 to vector<8x32xf32>
    %212 = arith.subf %211, %205 : vector<8x32xf32>
    %213 = arith.mulf %212, %210 : vector<8x32xf32>
    %214 = arith.mulf %205, %162 : vector<8x32xf32>
    %215 = arith.addf %213, %214 : vector<8x32xf32>
    %216 = tpu.concatenate %215, %185 in 1 : vector<8x32xf32>, vector<8x32xf32> -> vector<8x64xf32>
    %cst_44 = arith.constant dense<0.000000e+00> : vector<8x128xf32>
    %217 = tpu.matmul %216, %9, %cst_44 {dimension_numbers = #tpu.dot_dimension_numbers<[1], [0], [0], [1], [0, 0, 1, 1], [], []>} : vector<8x64xf32>, vector<64x128xf32>, vector<8x128xf32> -> vector<8x128xf32>
    %218 = vector.extract_strided_slice %217 {offsets = [0, 0], sizes = [8, 64], strides = [1, 1]} : vector<8x128xf32> to vector<8x64xf32>
    %219 = arith.addf %218, %16 : vector<8x64xf32>
    %220 = arith.negf %219 : vector<8x64xf32>
    %221 = math.exp %220 : vector<8x64xf32>
    %cst_45 = arith.constant 1.000000e+00 : f32
    %222 = vector.broadcast %cst_45 : f32 to vector<8x64xf32>
    %223 = arith.addf %222, %221 : vector<8x64xf32>
    %224 = arith.divf %222, %223 : vector<8x64xf32>
    %225 = vector.extract_strided_slice %224 {offsets = [0, 0], sizes = [8, 32], strides = [1, 1]} : vector<8x64xf32> to vector<8x32xf32>
    %226 = vector.extract_strided_slice %224 {offsets = [0, 32], sizes = [8, 32], strides = [1, 1]} : vector<8x64xf32> to vector<8x32xf32>
    %227 = vector.extract_strided_slice %217 {offsets = [0, 64], sizes = [8, 32], strides = [1, 1]} : vector<8x128xf32> to vector<8x32xf32>
    %228 = arith.addf %227, %19 : vector<8x32xf32>
    %229 = vector.extract_strided_slice %217 {offsets = [0, 96], sizes = [8, 32], strides = [1, 1]} : vector<8x128xf32> to vector<8x32xf32>
    %230 = arith.addf %229, %22 : vector<8x32xf32>
    %231 = arith.mulf %225, %230 : vector<8x32xf32>
    %232 = arith.addf %228, %231 : vector<8x32xf32>
    %233 = math.tanh %232 : vector<8x32xf32>
    %cst_46 = arith.constant 1.000000e+00 : f32
    %234 = vector.broadcast %cst_46 : f32 to vector<8x32xf32>
    %235 = arith.subf %234, %226 : vector<8x32xf32>
    %236 = arith.mulf %235, %233 : vector<8x32xf32>
    %237 = arith.mulf %226, %185 : vector<8x32xf32>
    %238 = arith.addf %236, %237 : vector<8x32xf32>
    %239 = vector.extract_strided_slice %7 {offsets = [4, 0, 0], sizes = [1, 8, 96], strides = [1, 1, 1]} : vector<8x8x96xf32> to vector<1x8x96xf32>
    %240 = vector.shape_cast %239 : vector<1x8x96xf32> to vector<8x96xf32>
    %cst_47 = arith.constant dense<0.000000e+00> : vector<8x96xf32>
    %241 = tpu.matmul %215, %8, %cst_47 {dimension_numbers = #tpu.dot_dimension_numbers<[1], [0], [0], [1], [0, 0, 1, 1], [], []>} : vector<8x32xf32>, vector<32x96xf32>, vector<8x96xf32> -> vector<8x96xf32>
    %242 = arith.addf %241, %13 : vector<8x96xf32>
    %243 = vector.extract_strided_slice %240 {offsets = [0, 0], sizes = [8, 32], strides = [1, 1]} : vector<8x96xf32> to vector<8x32xf32>
    %244 = vector.extract_strided_slice %242 {offsets = [0, 0], sizes = [8, 32], strides = [1, 1]} : vector<8x96xf32> to vector<8x32xf32>
    %245 = arith.addf %243, %244 : vector<8x32xf32>
    %246 = arith.negf %245 : vector<8x32xf32>
    %247 = math.exp %246 : vector<8x32xf32>
    %cst_48 = arith.constant 1.000000e+00 : f32
    %248 = vector.broadcast %cst_48 : f32 to vector<8x32xf32>
    %249 = arith.addf %248, %247 : vector<8x32xf32>
    %250 = arith.divf %248, %249 : vector<8x32xf32>
    %251 = vector.extract_strided_slice %240 {offsets = [0, 32], sizes = [8, 32], strides = [1, 1]} : vector<8x96xf32> to vector<8x32xf32>
    %252 = vector.extract_strided_slice %242 {offsets = [0, 32], sizes = [8, 32], strides = [1, 1]} : vector<8x96xf32> to vector<8x32xf32>
    %253 = arith.addf %251, %252 : vector<8x32xf32>
    %254 = arith.negf %253 : vector<8x32xf32>
    %255 = math.exp %254 : vector<8x32xf32>
    %cst_49 = arith.constant 1.000000e+00 : f32
    %256 = vector.broadcast %cst_49 : f32 to vector<8x32xf32>
    %257 = arith.addf %256, %255 : vector<8x32xf32>
    %258 = arith.divf %256, %257 : vector<8x32xf32>
    %259 = vector.extract_strided_slice %240 {offsets = [0, 64], sizes = [8, 32], strides = [1, 1]} : vector<8x96xf32> to vector<8x32xf32>
    %260 = vector.extract_strided_slice %242 {offsets = [0, 64], sizes = [8, 32], strides = [1, 1]} : vector<8x96xf32> to vector<8x32xf32>
    %261 = arith.mulf %250, %260 : vector<8x32xf32>
    %262 = arith.addf %259, %261 : vector<8x32xf32>
    %263 = math.tanh %262 : vector<8x32xf32>
    %cst_50 = arith.constant 1.000000e+00 : f32
    %264 = vector.broadcast %cst_50 : f32 to vector<8x32xf32>
    %265 = arith.subf %264, %258 : vector<8x32xf32>
    %266 = arith.mulf %265, %263 : vector<8x32xf32>
    %267 = arith.mulf %258, %215 : vector<8x32xf32>
    %268 = arith.addf %266, %267 : vector<8x32xf32>
    %269 = tpu.concatenate %268, %238 in 1 : vector<8x32xf32>, vector<8x32xf32> -> vector<8x64xf32>
    %cst_51 = arith.constant dense<0.000000e+00> : vector<8x128xf32>
    %270 = tpu.matmul %269, %9, %cst_51 {dimension_numbers = #tpu.dot_dimension_numbers<[1], [0], [0], [1], [0, 0, 1, 1], [], []>} : vector<8x64xf32>, vector<64x128xf32>, vector<8x128xf32> -> vector<8x128xf32>
    %271 = vector.extract_strided_slice %270 {offsets = [0, 0], sizes = [8, 64], strides = [1, 1]} : vector<8x128xf32> to vector<8x64xf32>
    %272 = arith.addf %271, %16 : vector<8x64xf32>
    %273 = arith.negf %272 : vector<8x64xf32>
    %274 = math.exp %273 : vector<8x64xf32>
    %cst_52 = arith.constant 1.000000e+00 : f32
    %275 = vector.broadcast %cst_52 : f32 to vector<8x64xf32>
    %276 = arith.addf %275, %274 : vector<8x64xf32>
    %277 = arith.divf %275, %276 : vector<8x64xf32>
    %278 = vector.extract_strided_slice %277 {offsets = [0, 0], sizes = [8, 32], strides = [1, 1]} : vector<8x64xf32> to vector<8x32xf32>
    %279 = vector.extract_strided_slice %277 {offsets = [0, 32], sizes = [8, 32], strides = [1, 1]} : vector<8x64xf32> to vector<8x32xf32>
    %280 = vector.extract_strided_slice %270 {offsets = [0, 64], sizes = [8, 32], strides = [1, 1]} : vector<8x128xf32> to vector<8x32xf32>
    %281 = arith.addf %280, %19 : vector<8x32xf32>
    %282 = vector.extract_strided_slice %270 {offsets = [0, 96], sizes = [8, 32], strides = [1, 1]} : vector<8x128xf32> to vector<8x32xf32>
    %283 = arith.addf %282, %22 : vector<8x32xf32>
    %284 = arith.mulf %278, %283 : vector<8x32xf32>
    %285 = arith.addf %281, %284 : vector<8x32xf32>
    %286 = math.tanh %285 : vector<8x32xf32>
    %cst_53 = arith.constant 1.000000e+00 : f32
    %287 = vector.broadcast %cst_53 : f32 to vector<8x32xf32>
    %288 = arith.subf %287, %279 : vector<8x32xf32>
    %289 = arith.mulf %288, %286 : vector<8x32xf32>
    %290 = arith.mulf %279, %238 : vector<8x32xf32>
    %291 = arith.addf %289, %290 : vector<8x32xf32>
    %292 = vector.extract_strided_slice %7 {offsets = [5, 0, 0], sizes = [1, 8, 96], strides = [1, 1, 1]} : vector<8x8x96xf32> to vector<1x8x96xf32>
    %293 = vector.shape_cast %292 : vector<1x8x96xf32> to vector<8x96xf32>
    %cst_54 = arith.constant dense<0.000000e+00> : vector<8x96xf32>
    %294 = tpu.matmul %268, %8, %cst_54 {dimension_numbers = #tpu.dot_dimension_numbers<[1], [0], [0], [1], [0, 0, 1, 1], [], []>} : vector<8x32xf32>, vector<32x96xf32>, vector<8x96xf32> -> vector<8x96xf32>
    %295 = arith.addf %294, %13 : vector<8x96xf32>
    %296 = vector.extract_strided_slice %293 {offsets = [0, 0], sizes = [8, 32], strides = [1, 1]} : vector<8x96xf32> to vector<8x32xf32>
    %297 = vector.extract_strided_slice %295 {offsets = [0, 0], sizes = [8, 32], strides = [1, 1]} : vector<8x96xf32> to vector<8x32xf32>
    %298 = arith.addf %296, %297 : vector<8x32xf32>
    %299 = arith.negf %298 : vector<8x32xf32>
    %300 = math.exp %299 : vector<8x32xf32>
    %cst_55 = arith.constant 1.000000e+00 : f32
    %301 = vector.broadcast %cst_55 : f32 to vector<8x32xf32>
    %302 = arith.addf %301, %300 : vector<8x32xf32>
    %303 = arith.divf %301, %302 : vector<8x32xf32>
    %304 = vector.extract_strided_slice %293 {offsets = [0, 32], sizes = [8, 32], strides = [1, 1]} : vector<8x96xf32> to vector<8x32xf32>
    %305 = vector.extract_strided_slice %295 {offsets = [0, 32], sizes = [8, 32], strides = [1, 1]} : vector<8x96xf32> to vector<8x32xf32>
    %306 = arith.addf %304, %305 : vector<8x32xf32>
    %307 = arith.negf %306 : vector<8x32xf32>
    %308 = math.exp %307 : vector<8x32xf32>
    %cst_56 = arith.constant 1.000000e+00 : f32
    %309 = vector.broadcast %cst_56 : f32 to vector<8x32xf32>
    %310 = arith.addf %309, %308 : vector<8x32xf32>
    %311 = arith.divf %309, %310 : vector<8x32xf32>
    %312 = vector.extract_strided_slice %293 {offsets = [0, 64], sizes = [8, 32], strides = [1, 1]} : vector<8x96xf32> to vector<8x32xf32>
    %313 = vector.extract_strided_slice %295 {offsets = [0, 64], sizes = [8, 32], strides = [1, 1]} : vector<8x96xf32> to vector<8x32xf32>
    %314 = arith.mulf %303, %313 : vector<8x32xf32>
    %315 = arith.addf %312, %314 : vector<8x32xf32>
    %316 = math.tanh %315 : vector<8x32xf32>
    %cst_57 = arith.constant 1.000000e+00 : f32
    %317 = vector.broadcast %cst_57 : f32 to vector<8x32xf32>
    %318 = arith.subf %317, %311 : vector<8x32xf32>
    %319 = arith.mulf %318, %316 : vector<8x32xf32>
    %320 = arith.mulf %311, %268 : vector<8x32xf32>
    %321 = arith.addf %319, %320 : vector<8x32xf32>
    %322 = tpu.concatenate %321, %291 in 1 : vector<8x32xf32>, vector<8x32xf32> -> vector<8x64xf32>
    %cst_58 = arith.constant dense<0.000000e+00> : vector<8x128xf32>
    %323 = tpu.matmul %322, %9, %cst_58 {dimension_numbers = #tpu.dot_dimension_numbers<[1], [0], [0], [1], [0, 0, 1, 1], [], []>} : vector<8x64xf32>, vector<64x128xf32>, vector<8x128xf32> -> vector<8x128xf32>
    %324 = vector.extract_strided_slice %323 {offsets = [0, 0], sizes = [8, 64], strides = [1, 1]} : vector<8x128xf32> to vector<8x64xf32>
    %325 = arith.addf %324, %16 : vector<8x64xf32>
    %326 = arith.negf %325 : vector<8x64xf32>
    %327 = math.exp %326 : vector<8x64xf32>
    %cst_59 = arith.constant 1.000000e+00 : f32
    %328 = vector.broadcast %cst_59 : f32 to vector<8x64xf32>
    %329 = arith.addf %328, %327 : vector<8x64xf32>
    %330 = arith.divf %328, %329 : vector<8x64xf32>
    %331 = vector.extract_strided_slice %330 {offsets = [0, 0], sizes = [8, 32], strides = [1, 1]} : vector<8x64xf32> to vector<8x32xf32>
    %332 = vector.extract_strided_slice %330 {offsets = [0, 32], sizes = [8, 32], strides = [1, 1]} : vector<8x64xf32> to vector<8x32xf32>
    %333 = vector.extract_strided_slice %323 {offsets = [0, 64], sizes = [8, 32], strides = [1, 1]} : vector<8x128xf32> to vector<8x32xf32>
    %334 = arith.addf %333, %19 : vector<8x32xf32>
    %335 = vector.extract_strided_slice %323 {offsets = [0, 96], sizes = [8, 32], strides = [1, 1]} : vector<8x128xf32> to vector<8x32xf32>
    %336 = arith.addf %335, %22 : vector<8x32xf32>
    %337 = arith.mulf %331, %336 : vector<8x32xf32>
    %338 = arith.addf %334, %337 : vector<8x32xf32>
    %339 = math.tanh %338 : vector<8x32xf32>
    %cst_60 = arith.constant 1.000000e+00 : f32
    %340 = vector.broadcast %cst_60 : f32 to vector<8x32xf32>
    %341 = arith.subf %340, %332 : vector<8x32xf32>
    %342 = arith.mulf %341, %339 : vector<8x32xf32>
    %343 = arith.mulf %332, %291 : vector<8x32xf32>
    %344 = arith.addf %342, %343 : vector<8x32xf32>
    %345 = vector.extract_strided_slice %7 {offsets = [6, 0, 0], sizes = [1, 8, 96], strides = [1, 1, 1]} : vector<8x8x96xf32> to vector<1x8x96xf32>
    %346 = vector.shape_cast %345 : vector<1x8x96xf32> to vector<8x96xf32>
    %cst_61 = arith.constant dense<0.000000e+00> : vector<8x96xf32>
    %347 = tpu.matmul %321, %8, %cst_61 {dimension_numbers = #tpu.dot_dimension_numbers<[1], [0], [0], [1], [0, 0, 1, 1], [], []>} : vector<8x32xf32>, vector<32x96xf32>, vector<8x96xf32> -> vector<8x96xf32>
    %348 = arith.addf %347, %13 : vector<8x96xf32>
    %349 = vector.extract_strided_slice %346 {offsets = [0, 0], sizes = [8, 32], strides = [1, 1]} : vector<8x96xf32> to vector<8x32xf32>
    %350 = vector.extract_strided_slice %348 {offsets = [0, 0], sizes = [8, 32], strides = [1, 1]} : vector<8x96xf32> to vector<8x32xf32>
    %351 = arith.addf %349, %350 : vector<8x32xf32>
    %352 = arith.negf %351 : vector<8x32xf32>
    %353 = math.exp %352 : vector<8x32xf32>
    %cst_62 = arith.constant 1.000000e+00 : f32
    %354 = vector.broadcast %cst_62 : f32 to vector<8x32xf32>
    %355 = arith.addf %354, %353 : vector<8x32xf32>
    %356 = arith.divf %354, %355 : vector<8x32xf32>
    %357 = vector.extract_strided_slice %346 {offsets = [0, 32], sizes = [8, 32], strides = [1, 1]} : vector<8x96xf32> to vector<8x32xf32>
    %358 = vector.extract_strided_slice %348 {offsets = [0, 32], sizes = [8, 32], strides = [1, 1]} : vector<8x96xf32> to vector<8x32xf32>
    %359 = arith.addf %357, %358 : vector<8x32xf32>
    %360 = arith.negf %359 : vector<8x32xf32>
    %361 = math.exp %360 : vector<8x32xf32>
    %cst_63 = arith.constant 1.000000e+00 : f32
    %362 = vector.broadcast %cst_63 : f32 to vector<8x32xf32>
    %363 = arith.addf %362, %361 : vector<8x32xf32>
    %364 = arith.divf %362, %363 : vector<8x32xf32>
    %365 = vector.extract_strided_slice %346 {offsets = [0, 64], sizes = [8, 32], strides = [1, 1]} : vector<8x96xf32> to vector<8x32xf32>
    %366 = vector.extract_strided_slice %348 {offsets = [0, 64], sizes = [8, 32], strides = [1, 1]} : vector<8x96xf32> to vector<8x32xf32>
    %367 = arith.mulf %356, %366 : vector<8x32xf32>
    %368 = arith.addf %365, %367 : vector<8x32xf32>
    %369 = math.tanh %368 : vector<8x32xf32>
    %cst_64 = arith.constant 1.000000e+00 : f32
    %370 = vector.broadcast %cst_64 : f32 to vector<8x32xf32>
    %371 = arith.subf %370, %364 : vector<8x32xf32>
    %372 = arith.mulf %371, %369 : vector<8x32xf32>
    %373 = arith.mulf %364, %321 : vector<8x32xf32>
    %374 = arith.addf %372, %373 : vector<8x32xf32>
    %375 = tpu.concatenate %374, %344 in 1 : vector<8x32xf32>, vector<8x32xf32> -> vector<8x64xf32>
    %cst_65 = arith.constant dense<0.000000e+00> : vector<8x128xf32>
    %376 = tpu.matmul %375, %9, %cst_65 {dimension_numbers = #tpu.dot_dimension_numbers<[1], [0], [0], [1], [0, 0, 1, 1], [], []>} : vector<8x64xf32>, vector<64x128xf32>, vector<8x128xf32> -> vector<8x128xf32>
    %377 = vector.extract_strided_slice %376 {offsets = [0, 0], sizes = [8, 64], strides = [1, 1]} : vector<8x128xf32> to vector<8x64xf32>
    %378 = arith.addf %377, %16 : vector<8x64xf32>
    %379 = arith.negf %378 : vector<8x64xf32>
    %380 = math.exp %379 : vector<8x64xf32>
    %cst_66 = arith.constant 1.000000e+00 : f32
    %381 = vector.broadcast %cst_66 : f32 to vector<8x64xf32>
    %382 = arith.addf %381, %380 : vector<8x64xf32>
    %383 = arith.divf %381, %382 : vector<8x64xf32>
    %384 = vector.extract_strided_slice %383 {offsets = [0, 0], sizes = [8, 32], strides = [1, 1]} : vector<8x64xf32> to vector<8x32xf32>
    %385 = vector.extract_strided_slice %383 {offsets = [0, 32], sizes = [8, 32], strides = [1, 1]} : vector<8x64xf32> to vector<8x32xf32>
    %386 = vector.extract_strided_slice %376 {offsets = [0, 64], sizes = [8, 32], strides = [1, 1]} : vector<8x128xf32> to vector<8x32xf32>
    %387 = arith.addf %386, %19 : vector<8x32xf32>
    %388 = vector.extract_strided_slice %376 {offsets = [0, 96], sizes = [8, 32], strides = [1, 1]} : vector<8x128xf32> to vector<8x32xf32>
    %389 = arith.addf %388, %22 : vector<8x32xf32>
    %390 = arith.mulf %384, %389 : vector<8x32xf32>
    %391 = arith.addf %387, %390 : vector<8x32xf32>
    %392 = math.tanh %391 : vector<8x32xf32>
    %cst_67 = arith.constant 1.000000e+00 : f32
    %393 = vector.broadcast %cst_67 : f32 to vector<8x32xf32>
    %394 = arith.subf %393, %385 : vector<8x32xf32>
    %395 = arith.mulf %394, %392 : vector<8x32xf32>
    %396 = arith.mulf %385, %344 : vector<8x32xf32>
    %397 = arith.addf %395, %396 : vector<8x32xf32>
    %398 = vector.extract_strided_slice %7 {offsets = [7, 0, 0], sizes = [1, 8, 96], strides = [1, 1, 1]} : vector<8x8x96xf32> to vector<1x8x96xf32>
    %399 = vector.shape_cast %398 : vector<1x8x96xf32> to vector<8x96xf32>
    %cst_68 = arith.constant dense<0.000000e+00> : vector<8x96xf32>
    %400 = tpu.matmul %374, %8, %cst_68 {dimension_numbers = #tpu.dot_dimension_numbers<[1], [0], [0], [1], [0, 0, 1, 1], [], []>} : vector<8x32xf32>, vector<32x96xf32>, vector<8x96xf32> -> vector<8x96xf32>
    %401 = arith.addf %400, %13 : vector<8x96xf32>
    %402 = vector.extract_strided_slice %399 {offsets = [0, 0], sizes = [8, 32], strides = [1, 1]} : vector<8x96xf32> to vector<8x32xf32>
    %403 = vector.extract_strided_slice %401 {offsets = [0, 0], sizes = [8, 32], strides = [1, 1]} : vector<8x96xf32> to vector<8x32xf32>
    %404 = arith.addf %402, %403 : vector<8x32xf32>
    %405 = arith.negf %404 : vector<8x32xf32>
    %406 = math.exp %405 : vector<8x32xf32>
    %cst_69 = arith.constant 1.000000e+00 : f32
    %407 = vector.broadcast %cst_69 : f32 to vector<8x32xf32>
    %408 = arith.addf %407, %406 : vector<8x32xf32>
    %409 = arith.divf %407, %408 : vector<8x32xf32>
    %410 = vector.extract_strided_slice %399 {offsets = [0, 32], sizes = [8, 32], strides = [1, 1]} : vector<8x96xf32> to vector<8x32xf32>
    %411 = vector.extract_strided_slice %401 {offsets = [0, 32], sizes = [8, 32], strides = [1, 1]} : vector<8x96xf32> to vector<8x32xf32>
    %412 = arith.addf %410, %411 : vector<8x32xf32>
    %413 = arith.negf %412 : vector<8x32xf32>
    %414 = math.exp %413 : vector<8x32xf32>
    %cst_70 = arith.constant 1.000000e+00 : f32
    %415 = vector.broadcast %cst_70 : f32 to vector<8x32xf32>
    %416 = arith.addf %415, %414 : vector<8x32xf32>
    %417 = arith.divf %415, %416 : vector<8x32xf32>
    %418 = vector.extract_strided_slice %399 {offsets = [0, 64], sizes = [8, 32], strides = [1, 1]} : vector<8x96xf32> to vector<8x32xf32>
    %419 = vector.extract_strided_slice %401 {offsets = [0, 64], sizes = [8, 32], strides = [1, 1]} : vector<8x96xf32> to vector<8x32xf32>
    %420 = arith.mulf %409, %419 : vector<8x32xf32>
    %421 = arith.addf %418, %420 : vector<8x32xf32>
    %422 = math.tanh %421 : vector<8x32xf32>
    %cst_71 = arith.constant 1.000000e+00 : f32
    %423 = vector.broadcast %cst_71 : f32 to vector<8x32xf32>
    %424 = arith.subf %423, %417 : vector<8x32xf32>
    %425 = arith.mulf %424, %422 : vector<8x32xf32>
    %426 = arith.mulf %417, %374 : vector<8x32xf32>
    %427 = arith.addf %425, %426 : vector<8x32xf32>
    %428 = tpu.concatenate %427, %397 in 1 : vector<8x32xf32>, vector<8x32xf32> -> vector<8x64xf32>
    %cst_72 = arith.constant dense<0.000000e+00> : vector<8x128xf32>
    %429 = tpu.matmul %428, %9, %cst_72 {dimension_numbers = #tpu.dot_dimension_numbers<[1], [0], [0], [1], [0, 0, 1, 1], [], []>} : vector<8x64xf32>, vector<64x128xf32>, vector<8x128xf32> -> vector<8x128xf32>
    %430 = vector.extract_strided_slice %429 {offsets = [0, 0], sizes = [8, 64], strides = [1, 1]} : vector<8x128xf32> to vector<8x64xf32>
    %431 = arith.addf %430, %16 : vector<8x64xf32>
    %432 = arith.negf %431 : vector<8x64xf32>
    %433 = math.exp %432 : vector<8x64xf32>
    %cst_73 = arith.constant 1.000000e+00 : f32
    %434 = vector.broadcast %cst_73 : f32 to vector<8x64xf32>
    %435 = arith.addf %434, %433 : vector<8x64xf32>
    %436 = arith.divf %434, %435 : vector<8x64xf32>
    %437 = vector.extract_strided_slice %436 {offsets = [0, 0], sizes = [8, 32], strides = [1, 1]} : vector<8x64xf32> to vector<8x32xf32>
    %438 = vector.extract_strided_slice %436 {offsets = [0, 32], sizes = [8, 32], strides = [1, 1]} : vector<8x64xf32> to vector<8x32xf32>
    %439 = vector.extract_strided_slice %429 {offsets = [0, 64], sizes = [8, 32], strides = [1, 1]} : vector<8x128xf32> to vector<8x32xf32>
    %440 = arith.addf %439, %19 : vector<8x32xf32>
    %441 = vector.extract_strided_slice %429 {offsets = [0, 96], sizes = [8, 32], strides = [1, 1]} : vector<8x128xf32> to vector<8x32xf32>
    %442 = arith.addf %441, %22 : vector<8x32xf32>
    %443 = arith.mulf %437, %442 : vector<8x32xf32>
    %444 = arith.addf %440, %443 : vector<8x32xf32>
    %445 = math.tanh %444 : vector<8x32xf32>
    %cst_74 = arith.constant 1.000000e+00 : f32
    %446 = vector.broadcast %cst_74 : f32 to vector<8x32xf32>
    %447 = arith.subf %446, %438 : vector<8x32xf32>
    %448 = arith.mulf %447, %445 : vector<8x32xf32>
    %449 = arith.mulf %438, %397 : vector<8x32xf32>
    %450 = arith.addf %448, %449 : vector<8x32xf32>
    %c0_75 = arith.constant 0 : index
    %c0_76 = arith.constant 0 : index
    %c0_77 = arith.constant 0 : index
    %451 = vector.load %arg12[%c0_75, %c0_76, %c0_77] : memref<2x8x32xf32, #tpu.memory_space<vmem>>, vector<1x8x32xf32>
    %452 = vector.shape_cast %451 : vector<1x8x32xf32> to vector<8x32xf32>
    %453 = vector.shape_cast %427 : vector<8x32xf32> to vector<1x8x32xf32>
    tpu.vector_store %arg12[%c0_75, %c0_76, %c0_77], %453 {strides = array<i32>} : memref<2x8x32xf32, #tpu.memory_space<vmem>>, vector<1x8x32xf32>,
    %c1_78 = arith.constant 1 : index
    %c0_79 = arith.constant 0 : index
    %c0_80 = arith.constant 0 : index
    %454 = vector.load %arg12[%c1_78, %c0_79, %c0_80] : memref<2x8x32xf32, #tpu.memory_space<vmem>>, vector<1x8x32xf32>
    %455 = vector.shape_cast %454 : vector<1x8x32xf32> to vector<8x32xf32>
    %456 = vector.shape_cast %450 : vector<8x32xf32> to vector<1x8x32xf32>
    tpu.vector_store %arg12[%c1_78, %c0_79, %c0_80], %456 {strides = array<i32>} : memref<2x8x32xf32, #tpu.memory_space<vmem>>, vector<1x8x32xf32>,
    %457 = tpu.concatenate %79, %132, %185, %238, %291, %344, %397, %450 in 0 : vector<8x32xf32>, vector<8x32xf32>, vector<8x32xf32>, vector<8x32xf32>, vector<8x32xf32>, vector<8x32xf32>, vector<8x32xf32>, vector<8x32xf32> -> vector<64x32xf32>
    %c0_81 = arith.constant 0 : index
    %c0_82 = arith.constant 0 : index
    %458 = vector.load %arg9[%c0_81, %c0_82] : memref<32x16xf32, #tpu.memory_space<vmem>>, vector<32x16xf32>
    %cst_83 = arith.constant dense<0.000000e+00> : vector<64x16xf32>
    %459 = tpu.matmul %457, %458, %cst_83 {dimension_numbers = #tpu.dot_dimension_numbers<[1], [0], [0], [1], [0, 0, 1, 1], [], []>} : vector<64x32xf32>, vector<32x16xf32>, vector<64x16xf32> -> vector<64x16xf32>
    %c0_84 = arith.constant 0 : index
    %c0_85 = arith.constant 0 : index
    %460 = vector.load %arg10[%c0_84, %c0_85] : memref<1x16xf32, #tpu.memory_space<vmem>>, vector<1x16xf32>
    %461 = vector.broadcast %460 : vector<1x16xf32> to vector<64x16xf32>
    %462 = arith.addf %459, %461 : vector<64x16xf32>
    %463 = vector.shape_cast %462 : vector<64x16xf32> to vector<8x8x16xf32>
    %c0_86 = arith.constant 0 : index
    %c0_87 = arith.constant 0 : index
    %c0_88 = arith.constant 0 : index
    %464 = vector.load %arg11[%c0_86, %c0_87, %c0_88] : memref<8x8x16xf32, #tpu.memory_space<vmem>>, vector<8x8x16xf32>
    tpu.vector_store %arg11[%c0_86, %c0_87, %c0_88], %463 {strides = array<i32>} : memref<8x8x16xf32, #tpu.memory_space<vmem>>, vector<8x8x16xf32>,
    return
  }
  func.func @transform_0(%arg0: i32) -> (i32, i32, i32) {
    %c0_i32 = arith.constant 0 : i32
    %c0_i32_0 = arith.constant 0 : i32
    %c0_i32_1 = arith.constant 0 : i32
    %c0_i32_2 = arith.constant 0 : i32
    return %c0_i32, %c0_i32_0, %c0_i32_1 : i32, i32, i32
  }
  func.func @transform_1(%arg0: i32) -> (i32, i32, i32) {
    %c0_i32 = arith.constant 0 : i32
    %c0_i32_0 = arith.constant 0 : i32
    %c0_i32_1 = arith.constant 0 : i32
    %c0_i32_2 = arith.constant 0 : i32
    return %c0_i32, %c0_i32_0, %c0_i32_1 : i32, i32, i32
  }
  func.func @transform_2(%arg0: i32) -> (i32, i32) {
    %c0_i32 = arith.constant 0 : i32
    %c0_i32_0 = arith.constant 0 : i32
    %c0_i32_1 = arith.constant 0 : i32
    return %c0_i32, %c0_i32_0 : i32, i32
  }
  func.func @transform_3(%arg0: i32) -> (i32, i32) {
    %c0_i32 = arith.constant 0 : i32
    %c0_i32_0 = arith.constant 0 : i32
    %c0_i32_1 = arith.constant 0 : i32
    return %c0_i32, %c0_i32_0 : i32, i32
  }
  func.func @transform_4(%arg0: i32) -> (i32, i32) {
    %c0_i32 = arith.constant 0 : i32
    %c0_i32_0 = arith.constant 0 : i32
    %c0_i32_1 = arith.constant 0 : i32
    return %c0_i32, %c0_i32_0 : i32, i32
  }
  func.func @transform_5(%arg0: i32) -> (i32, i32) {
    %c0_i32 = arith.constant 0 : i32
    %c0_i32_0 = arith.constant 0 : i32
    %c0_i32_1 = arith.constant 0 : i32
    return %c0_i32, %c0_i32_0 : i32, i32
  }
  func.func @transform_6(%arg0: i32) -> (i32, i32) {
    %c0_i32 = arith.constant 0 : i32
    %c0_i32_0 = arith.constant 0 : i32
    %c0_i32_1 = arith.constant 0 : i32
    return %c0_i32, %c0_i32_0 : i32, i32
  }
  func.func @transform_7(%arg0: i32) -> (i32, i32) {
    %c0_i32 = arith.constant 0 : i32
    %c0_i32_0 = arith.constant 0 : i32
    %c0_i32_1 = arith.constant 0 : i32
    return %c0_i32, %c0_i32_0 : i32, i32
  }
  func.func @transform_8(%arg0: i32) -> (i32, i32) {
    %c0_i32 = arith.constant 0 : i32
    %c0_i32_0 = arith.constant 0 : i32
    %c0_i32_1 = arith.constant 0 : i32
    return %c0_i32, %c0_i32_0 : i32, i32
  }
  func.func @transform_9(%arg0: i32) -> (i32, i32) {
    %c0_i32 = arith.constant 0 : i32
    %c0_i32_0 = arith.constant 0 : i32
    %c0_i32_1 = arith.constant 0 : i32
    return %c0_i32, %c0_i32_0 : i32, i32
  }
  func.func @transform_10(%arg0: i32) -> (i32, i32, i32) {
    %c0_i32 = arith.constant 0 : i32
    %c0_i32_0 = arith.constant 0 : i32
    %c0_i32_1 = arith.constant 0 : i32
    %c0_i32_2 = arith.constant 0 : i32
    return %c0_i32, %c0_i32_0, %c0_i32_1 : i32, i32, i32
  }
  func.func @transform_11(%arg0: i32) -> (i32, i32, i32) {
    %c0_i32 = arith.constant 0 : i32
    %c0_i32_0 = arith.constant 0 : i32
    %c0_i32_1 = arith.constant 0 : i32
    %c0_i32_2 = arith.constant 0 : i32
    return %c0_i32, %c0_i32_0, %c0_i32_1 : i32, i32, i32
  }
}

</mosaic_0001>

<llo_original>
// kernel: rnn_decoder_forward.1
$region0: #{rnn_decoder_forward.1}
  #allocation0 [shape = 'u32[]', space=smem, size = 0x4, offset = 0x4, fixed_abs, tag = 'smem constant byte address 0x4 - core index']
  #allocation1 [shape = 'u32[144,128]{1,0:T(1,128)}', space=vmem, size = 0x12000, scoped, tag = 'internal scratch']
  %s0 = inlined_call_operand.vmem [shape: f32[8,8,16], index: 0, kind: input, shape index: {}]
  %s1 = inlined_call_operand.vmem [shape: f32[2,8,32], index: 1, kind: input, shape index: {}]
  %s2 = inlined_call_operand.vmem [shape: f32[16,96], index: 2, kind: input, shape index: {}]
  %s3 = inlined_call_operand.vmem [shape: f32[1,96], index: 3, kind: input, shape index: {}]
  %s4 = inlined_call_operand.vmem [shape: f32[32,96], index: 4, kind: input, shape index: {}]
  %s5 = inlined_call_operand.vmem [shape: f32[1,96], index: 5, kind: input, shape index: {}]
  %s6 = inlined_call_operand.vmem [shape: f32[64,128], index: 6, kind: input, shape index: {}]
  %s7 = inlined_call_operand.vmem [shape: f32[1,128], index: 7, kind: input, shape index: {}]
  %s8 = inlined_call_operand.vmem [shape: f32[32,16], index: 8, kind: input, shape index: {}]
  %s9 = inlined_call_operand.vmem [shape: f32[1,16], index: 9, kind: input, shape index: {}]
  %s10 = inlined_call_operand.vmem [shape: f32[8,8,16], index: 10, kind: output, shape index: {0}]
  %s11 = inlined_call_operand.vmem [shape: f32[2,8,32], index: 11, kind: output, shape index: {1}]
  %12 = xla_tuple %s10, %s11
  %s13 = sld [smem:[#allocation0]]
  $region58: #{rnn_decoder_forward.1} parent=0
    _
  %s15 = ssub.s32 1, %s13
  %s16 = scalar_select 0, %s15, %s13
  // Predicated region
  $region2: #{rnn_decoder_forward.1} parent=0 // pred_check
    _
  $region3: #{rnn_decoder_forward.1} parent=0 // pred_check_branch
    %18 = sbr.rel (0) target = $region5
  $region4: #{rnn_decoder_forward.1} parent=0 // pred_region
    _
  $region5: #{rnn_decoder_forward.1} parent=0 // pred_fallthru
    _
  // Predicated region
  $region6: #{rnn_decoder_forward.1} parent=0 // pred_check
    _
  $region7: #{rnn_decoder_forward.1} parent=0 // pred_check_branch
    %20 = sbr.rel (0) target = $region9
  $region8: #{rnn_decoder_forward.1} parent=0 // pred_region
    _
  $region9: #{rnn_decoder_forward.1} parent=0 // pred_fallthru
    _
  // Predicated region
  $region10: #{rnn_decoder_forward.1} parent=0 // pred_check
    _
  $region11: #{rnn_decoder_forward.1} parent=0 // pred_check_branch
    %22 = sbr.rel (0) target = $region13
  $region12: #{rnn_decoder_forward.1} parent=0 // pred_region
    _
  $region13: #{rnn_decoder_forward.1} parent=0 // pred_fallthru
    _
  // Predicated region
  $region14: #{rnn_decoder_forward.1} parent=0 // pred_check
    _
  $region15: #{rnn_decoder_forward.1} parent=0 // pred_check_branch
    %24 = sbr.rel (0) target = $region17
  $region16: #{rnn_decoder_forward.1} parent=0 // pred_region
    _
  $region17: #{rnn_decoder_forward.1} parent=0 // pred_fallthru
    _
  // Predicated region
  $region18: #{rnn_decoder_forward.1} parent=0 // pred_check
    _
  $region19: #{rnn_decoder_forward.1} parent=0 // pred_check_branch
    %26 = sbr.rel (0) target = $region21
  $region20: #{rnn_decoder_forward.1} parent=0 // pred_region
    _
  $region21: #{rnn_decoder_forward.1} parent=0 // pred_fallthru
    _
  // Predicated region
  $region22: #{rnn_decoder_forward.1} parent=0 // pred_check
    _
  $region23: #{rnn_decoder_forward.1} parent=0 // pred_check_branch
    %28 = sbr.rel (0) target = $region25
  $region24: #{rnn_decoder_forward.1} parent=0 // pred_region
    _
  $region25: #{rnn_decoder_forward.1} parent=0 // pred_fallthru
    _
  // Predicated region
  $region26: #{rnn_decoder_forward.1} parent=0 // pred_check
    _
  $region27: #{rnn_decoder_forward.1} parent=0 // pred_check_branch
    %30 = sbr.rel (0) target = $region29
  $region28: #{rnn_decoder_forward.1} parent=0 // pred_region
    _
  $region29: #{rnn_decoder_forward.1} parent=0 // pred_fallthru
    _
  // Predicated region
  $region30: #{rnn_decoder_forward.1} parent=0 // pred_check
    _
  $region31: #{rnn_decoder_forward.1} parent=0 // pred_check_branch
    %32 = sbr.rel (0) target = $region33
  $region32: #{rnn_decoder_forward.1} parent=0 // pred_region
    _
  $region33: #{rnn_decoder_forward.1} parent=0 // pred_fallthru
    _
  // Predicated region
  $region34: #{rnn_decoder_forward.1} parent=0 // pred_check
    _
  $region35: #{rnn_decoder_forward.1} parent=0 // pred_check_branch
    %34 = sbr.rel (0) target = $region37
  $region36: #{rnn_decoder_forward.1} parent=0 // pred_region
    _
  $region37: #{rnn_decoder_forward.1} parent=0 // pred_fallthru
    _
  // Predicated region
  $region38: #{rnn_decoder_forward.1} parent=0 // pred_check
    _
  $region39: #{rnn_decoder_forward.1} parent=0 // pred_check_branch
    %36 = sbr.rel (0) target = $region41
  $region40: #{rnn_decoder_forward.1} parent=0 // pred_region
    _
  $region41: #{rnn_decoder_forward.1} parent=0 // pred_fallthru
    _
  %v37 = vld [vmem:[%s0] sm:$0xff]
  %v38 = vld [vmem:[%s0 + $0x8] sm:$0xff]
  %v39 = vld [vmem:[%s0 + $0x10] sm:$0xff]
  %v40 = vld [vmem:[%s0 + $0x18] sm:$0xff]
  %v41 = vld [vmem:[%s0 + $0x20] sm:$0xff]
  %v42 = vld [vmem:[%s0 + $0x28] sm:$0xff]
  %v43 = vld [vmem:[%s0 + $0x30] sm:$0xff]
  %v44 = vld [vmem:[%s0 + $0x38] sm:$0xff]
  %v45 = vld [vmem:[%s2] sm:$0xff]
  %v46 = vld [vmem:[%s2 + $0x8] sm:$0xff]
  %v47 = vld [vmem:[%s3] sm:$0x1]
  %v49 = vlaneseq
  %v50 = vshrl.u32 %v49, 7
  %v51 = vsub.s32 0, %v50
  %v52 = vrot.slane %v47, %v51
  %vm54 = vcmask 130048
  %v56 = vsel %vm54, %v37, 0
  %v59 = vsel %vm54, %v38, 0
  %v62 = vsel %vm54, %v39, 0
  %v65 = vsel %vm54, %v40, 0
  %v68 = vsel %vm54, %v41, 0
  %v71 = vsel %vm54, %v42, 0
  %v74 = vsel %vm54, %v43, 0
  %v77 = vsel %vm54, %v44, 0
  %79 = vmatprep.subr.mxu0 0.0
  %80 = vmatpush1.msra.mxu0 %v45
  %81 = vmatprep.subr.mxu0 0.0
  %82 = vmatpush1.msra.mxu0 %v46
  %83 = vmatprep.subr.mxu0 0.0
  %84 = vmatpush1.msra.mxu0 0.0
  %85 = vmatprep.subr.mxu0 0.0
  %86 = vmatpush1.msra.mxu0 0.0
  %87 = vmatprep.subr.mxu0 0.0
  %88 = vmatpush1.msra.mxu0 0.0
  %89 = vmatprep.subr.mxu0 0.0
  %90 = vmatpush1.msra.mxu0 0.0
  %91 = vmatprep.subr.mxu0 0.0
  %92 = vmatpush1.msra.mxu0 0.0
  %93 = vmatprep.subr.mxu0 0.0
  %94 = vmatpush1.msra.mxu0 0.0
  %95 = vmatprep.subr.mxu0 0.0
  %96 = vmatpush1.msra.mxu0 0.0
  %97 = vmatprep.subr.mxu0 0.0
  %98 = vmatpush1.msra.mxu0 0.0
  %99 = vmatprep.subr.mxu0 0.0
  %100 = vmatpush1.msra.mxu0 0.0
  %101 = vmatprep.subr.mxu0 0.0
  %102 = vmatpush1.msra.mxu0 0.0
  %103 = vmatprep.subr.mxu0 0.0
  %104 = vmatpush1.msra.mxu0 0.0
  %105 = vmatprep.subr.mxu0 0.0
  %106 = vmatpush1.msra.mxu0 0.0
  %107 = vmatprep.subr.mxu0 0.0
  %108 = vmatpush1.msra.mxu0 0.0
  %109 = vmatprep.subr.mxu0 0.0
  %110 = vmatpush1.msra.mxu0 0.0
  %111 = vmatprep.subr.mxu0 0.0
  %112 = vmatpush1.msra.mxu0 0.0
  %113 = vmatprep.subr.mxu0 0.0
  %114 = vmatpush1.msra.mxu0 0.0
  %115 = vmatprep.subr.mxu0 0.0
  %116 = vmatpush1.msra.mxu0 0.0
  %117 = vmatprep.subr.mxu0 0.0
  %118 = vmatpush1.msra.mxu0 0.0
  %119 = vmatprep.subr.mxu0 0.0
  %120 = vmatpush1.msra.mxu0 0.0
  %121 = vmatprep.subr.mxu0 0.0
  %122 = vmatpush1.msra.mxu0 0.0
  %123 = vmatprep.subr.mxu0 0.0
  %124 = vmatpush1.msra.mxu0 0.0
  %125 = vmatprep.subr.mxu0 0.0
  %126 = vmatpush1.msra.mxu0 0.0
  %127 = vmatprep.subr.mxu0 0.0
  %128 = vmatpush1.msra.mxu0 0.0
  %129 = vmatprep.subr.mxu0 0.0
  %130 = vmatpush1.msra.mxu0 0.0
  %131 = vmatprep.subr.mxu0 0.0
  %132 = vmatpush1.msra.mxu0 0.0
  %133 = vmatprep.subr.mxu0 0.0
  %134 = vmatpush1.msra.mxu0 0.0
  %135 = vmatprep.subr.mxu0 0.0
  %136 = vmatpush1.msra.mxu0 0.0
  %137 = vmatprep.subr.mxu0 0.0
  %138 = vmatpush1.msra.mxu0 0.0
  %139 = vmatprep.subr.mxu0 0.0
  %140 = vmatpush1.msra.mxu0 0.0
  %141 = vmatprep.subr.mxu0 0.0
  %142 = vmatpush1.msra.mxu0 0.0
  %143 = vmatprep.mubr.f32.mxu0 0.0
  %144 = vmatmul.mubr.f32.gmra.mrb[0].mxu0 %v56
  %v145 = vpop.f32.mrb[0].mxu0
  %v146 = vadd.f32 %v52, %v145
  %v147 = vpop.f32.mrb[0].mxu0
  %148 = vmatprep.mubr.f32.mxu0 0.0
  %149 = vmatmul.mubr.f32.gmra.mrb[0].mxu0 %v59
  %v150 = vpop.f32.mrb[0].mxu0
  %v151 = vadd.f32 %v52, %v150
  %v152 = vpop.f32.mrb[0].mxu0
  %153 = vmatprep.mubr.f32.mxu0 0.0
  %154 = vmatmul.mubr.f32.gmra.mrb[0].mxu0 %v62
  %v155 = vpop.f32.mrb[0].mxu0
  %v156 = vadd.f32 %v52, %v155
  %v157 = vpop.f32.mrb[0].mxu0
  %158 = vmatprep.mubr.f32.mxu0 0.0
  %159 = vmatmul.mubr.f32.gmra.mrb[0].mxu0 %v65
  %v160 = vpop.f32.mrb[0].mxu0
  %v161 = vadd.f32 %v52, %v160
  %v162 = vpop.f32.mrb[0].mxu0
  %163 = vmatprep.mubr.f32.mxu0 0.0
  %164 = vmatmul.mubr.f32.gmra.mrb[0].mxu0 %v68
  %v165 = vpop.f32.mrb[0].mxu0
  %v166 = vadd.f32 %v52, %v165
  %v167 = vpop.f32.mrb[0].mxu0
  %168 = vmatprep.mubr.f32.mxu0 0.0
  %169 = vmatmul.mubr.f32.gmra.mrb[0].mxu0 %v71
  %v170 = vpop.f32.mrb[0].mxu0
  %v171 = vadd.f32 %v52, %v170
  %v172 = vpop.f32.mrb[0].mxu0
  %173 = vmatprep.mubr.f32.mxu0 0.0
  %174 = vmatmul.mubr.f32.gmra.mrb[0].mxu0 %v74
  %v175 = vpop.f32.mrb[0].mxu0
  %v176 = vadd.f32 %v52, %v175
  %v177 = vpop.f32.mrb[0].mxu0
  %178 = vmatprep.mubr.f32.mxu0 0.0
  %179 = vmatmul.mubr.f32.gmra.mrb[0].mxu0 %v77
  %v180 = vpop.f32.mrb[0].mxu0
  %v181 = vadd.f32 %v52, %v180
  %v182 = vpop.f32.mrb[0].mxu0
  %183 = vdwg.mxu0
  %v184 = vld [vmem:[%s4] sm:$0xff]
  %v185 = vld [vmem:[%s4 + $0x8] sm:$0xff]
  %v186 = vld [vmem:[%s4 + $0x10] sm:$0xff]
  %v187 = vld [vmem:[%s4 + $0x18] sm:$0xff]
  %v188 = vld [vmem:[%s6] sm:$0xff]
  %v189 = vld [vmem:[%s6 + $0x8] sm:$0xff]
  %v190 = vld [vmem:[%s6 + $0x10] sm:$0xff]
  %v191 = vld [vmem:[%s6 + $0x18] sm:$0xff]
  %v192 = vld [vmem:[%s6 + $0x20] sm:$0xff]
  %v193 = vld [vmem:[%s6 + $0x28] sm:$0xff]
  %v194 = vld [vmem:[%s6 + $0x30] sm:$0xff]
  %v195 = vld [vmem:[%s6 + $0x38] sm:$0xff]
  %v196 = vld [vmem:[%s7] sm:$0x1]
  %v197 = vld [vmem:[%s5] sm:$0x1]
  %v199 = vlaneseq
  %v200 = vshrl.u32 %v199, 7
  %v201 = vsub.s32 0, %v200
  %v202 = vrot.slane %v197, %v201
  %v205 = vlaneseq
  %v206 = vshrl.u32 %v205, 7
  %v207 = vsub.s32 0, %v206
  %v208 = vrot.slane %v196, %v207
  %v210 = vld [vmem:[%s1] sm:$0xff]
  %s211 = scalar_lea.vmem %s1, 8
  %v212 = vld [vmem:[%s211] sm:$0xff]
  %vm213 = vcmask 261120
  %v215 = vsel %vm213, %v210, 0
  %217 = vmatprep.subr.mxu0 0.0
  %218 = vmatpush1.msra.mxu0 %v184
  %219 = vmatprep.subr.mxu0 0.0
  %220 = vmatpush1.msra.mxu0 %v185
  %221 = vmatprep.subr.mxu0 0.0
  %222 = vmatpush1.msra.mxu0 %v186
  %223 = vmatprep.subr.mxu0 0.0
  %224 = vmatpush1.msra.mxu0 %v187
  %225 = vmatprep.subr.mxu0 0.0
  %226 = vmatpush1.msra.mxu0 0.0
  %227 = vmatprep.subr.mxu0 0.0
  %228 = vmatpush1.msra.mxu0 0.0
  %229 = vmatprep.subr.mxu0 0.0
  %230 = vmatpush1.msra.mxu0 0.0
  %231 = vmatprep.subr.mxu0 0.0
  %232 = vmatpush1.msra.mxu0 0.0
  %233 = vmatprep.subr.mxu0 0.0
  %234 = vmatpush1.msra.mxu0 0.0
  %235 = vmatprep.subr.mxu0 0.0
  %236 = vmatpush1.msra.mxu0 0.0
  %237 = vmatprep.subr.mxu0 0.0
  %238 = vmatpush1.msra.mxu0 0.0
  %239 = vmatprep.subr.mxu0 0.0
  %240 = vmatpush1.msra.mxu0 0.0
  %241 = vmatprep.subr.mxu0 0.0
  %242 = vmatpush1.msra.mxu0 0.0
  %243 = vmatprep.subr.mxu0 0.0
  %244 = vmatpush1.msra.mxu0 0.0
  %245 = vmatprep.subr.mxu0 0.0
  %246 = vmatpush1.msra.mxu0 0.0
  %247 = vmatprep.subr.mxu0 0.0
  %248 = vmatpush1.msra.mxu0 0.0
  %249 = vmatprep.subr.mxu0 0.0
  %250 = vmatpush1.msra.mxu0 0.0
  %251 = vmatprep.subr.mxu0 0.0
  %252 = vmatpush1.msra.mxu0 0.0
  %253 = vmatprep.subr.mxu0 0.0
  %254 = vmatpush1.msra.mxu0 0.0
  %255 = vmatprep.subr.mxu0 0.0
  %256 = vmatpush1.msra.mxu0 0.0
  %257 = vmatprep.subr.mxu0 0.0
  %258 = vmatpush1.msra.mxu0 0.0
  %259 = vmatprep.subr.mxu0 0.0
  %260 = vmatpush1.msra.mxu0 0.0
  %261 = vmatprep.subr.mxu0 0.0
  %262 = vmatpush1.msra.mxu0 0.0
  %263 = vmatprep.subr.mxu0 0.0
  %264 = vmatpush1.msra.mxu0 0.0
  %265 = vmatprep.subr.mxu0 0.0
  %266 = vmatpush1.msra.mxu0 0.0
  %267 = vmatprep.subr.mxu0 0.0
  %268 = vmatpush1.msra.mxu0 0.0
  %269 = vmatprep.subr.mxu0 0.0
  %270 = vmatpush1.msra.mxu0 0.0
  %271 = vmatprep.subr.mxu0 0.0
  %272 = vmatpush1.msra.mxu0 0.0
  %273 = vmatprep.subr.mxu0 0.0
  %274 = vmatpush1.msra.mxu0 0.0
  %275 = vmatprep.subr.mxu0 0.0
  %276 = vmatpush1.msra.mxu0 0.0
  %277 = vmatprep.subr.mxu0 0.0
  %278 = vmatpush1.msra.mxu0 0.0
  %279 = vmatprep.subr.mxu0 0.0
  %280 = vmatpush1.msra.mxu0 0.0
  %281 = vmatprep.mubr.f32.mxu0 0.0
  %282 = vmatmul.mubr.f32.gmra.mrb[0].mxu0 %v215
  %v283 = vpop.f32.mrb[0].mxu0
  %v284 = vadd.f32 %v202, %v283
  %v285 = vpop.f32.mrb[0].mxu0
  %286 = vdwg.mxu0
  %v287 = vadd.f32 %v146, %v284
  %v288 = vxor.u32 %v287, 2147483648
  %v289 = vmul.f32 %v288, 1.442695
  %v290 = vpow.pop %v289
  %v291 = vadd.f32 %v290, 1.0
  %v292 = vrcp.pop %v291
  %v293 = vmul.f32 1.0, %v292
  %295 = vrot.lane.b32.xlu0 %v284, 64
  %v296 = vpop.permute.xlu0 %295
  %v298 = vmul.f32 %v293, %v296
  %300 = vrot.lane.b32.xlu0 %v298, 64
  %v301 = vpop.permute.xlu0 %300
  %v303 = vadd.f32 %v146, %v301
  %v304 = vtanh.pop %v303
  %v305 = vsub.f32 1.0, %v293
  %307 = vrot.lane.b32.xlu0 %v304, 96
  %v308 = vpop.permute.xlu0 %307
  %v310 = vmul.f32 %v305, %v308
  %311 = vrot.lane.b32.xlu0 %v210, 32
  %v312 = vpop.permute.xlu0 %311
  %v314 = vmul.f32 %v293, %v312
  %v315 = vadd.f32 %v310, %v314
  %317 = vrot.lane.b32.xlu0 %v315, 96
  %v318 = vpop.permute.xlu0 %317
  %321 = vrot.lane.b32.xlu0 %v212, 32
  %v322 = vpop.permute.xlu0 %321
  %v324 = vsel %vm213, %v318, %v322
  %vm325 = vcmask 523264
  %v327 = vsel %vm325, %v324, 0
  %329 = vmatprep.subr.mxu0 0.0
  %330 = vmatpush1.msra.mxu0 %v188
  %331 = vmatprep.subr.mxu0 0.0
  %332 = vmatpush1.msra.mxu0 %v189
  %333 = vmatprep.subr.mxu0 0.0
  %334 = vmatpush1.msra.mxu0 %v190
  %335 = vmatprep.subr.mxu0 0.0
  %336 = vmatpush1.msra.mxu0 %v191
  %337 = vmatprep.subr.mxu0 0.0
  %338 = vmatpush1.msra.mxu0 %v192
  %339 = vmatprep.subr.mxu0 0.0
  %340 = vmatpush1.msra.mxu0 %v193
  %341 = vmatprep.subr.mxu0 0.0
  %342 = vmatpush1.msra.mxu0 %v194
  %343 = vmatprep.subr.mxu0 0.0
  %344 = vmatpush1.msra.mxu0 %v195
  %345 = vmatprep.subr.mxu0 0.0
  %346 = vmatpush1.msra.mxu0 0.0
  %347 = vmatprep.subr.mxu0 0.0
  %348 = vmatpush1.msra.mxu0 0.0
  %349 = vmatprep.subr.mxu0 0.0
  %350 = vmatpush1.msra.mxu0 0.0
  %351 = vmatprep.subr.mxu0 0.0
  %352 = vmatpush1.msra.mxu0 0.0
  %353 = vmatprep.subr.mxu0 0.0
  %354 = vmatpush1.msra.mxu0 0.0
  %355 = vmatprep.subr.mxu0 0.0
  %356 = vmatpush1.msra.mxu0 0.0
  %357 = vmatprep.subr.mxu0 0.0
  %358 = vmatpush1.msra.mxu0 0.0
  %359 = vmatprep.subr.mxu0 0.0
  %360 = vmatpush1.msra.mxu0 0.0
  %361 = vmatprep.subr.mxu0 0.0
  %362 = vmatpush1.msra.mxu0 0.0
  %363 = vmatprep.subr.mxu0 0.0
  %364 = vmatpush1.msra.mxu0 0.0
  %365 = vmatprep.subr.mxu0 0.0
  %366 = vmatpush1.msra.mxu0 0.0
  %367 = vmatprep.subr.mxu0 0.0
  %368 = vmatpush1.msra.mxu0 0.0
  %369 = vmatprep.subr.mxu0 0.0
  %370 = vmatpush1.msra.mxu0 0.0
  %371 = vmatprep.subr.mxu0 0.0
  %372 = vmatpush1.msra.mxu0 0.0
  %373 = vmatprep.subr.mxu0 0.0
  %374 = vmatpush1.msra.mxu0 0.0
  %375 = vmatprep.subr.mxu0 0.0
  %376 = vmatpush1.msra.mxu0 0.0
  %377 = vmatprep.subr.mxu0 0.0
  %378 = vmatpush1.msra.mxu0 0.0
  %379 = vmatprep.subr.mxu0 0.0
  %380 = vmatpush1.msra.mxu0 0.0
  %381 = vmatprep.subr.mxu0 0.0
  %382 = vmatpush1.msra.mxu0 0.0
  %383 = vmatprep.subr.mxu0 0.0
  %384 = vmatpush1.msra.mxu0 0.0
  %385 = vmatprep.subr.mxu0 0.0
  %386 = vmatpush1.msra.mxu0 0.0
  %387 = vmatprep.subr.mxu0 0.0
  %388 = vmatpush1.msra.mxu0 0.0
  %389 = vmatprep.subr.mxu0 0.0
  %390 = vmatpush1.msra.mxu0 0.0
  %391 = vmatprep.subr.mxu0 0.0
  %392 = vmatpush1.msra.mxu0 0.0
  %393 = vmatprep.mubr.f32.mxu0 0.0
  %394 = vmatmul.mubr.f32.gmra.mrb[0].mxu0 %v327
  %v395 = vpop.f32.mrb[0].mxu0
  %v396 = vadd.f32 0.0, %v395
  %v397 = vpop.f32.mrb[0].mxu0
  %398 = vdwg.mxu0
  %v399 = vadd.f32 %v396, %v208
  %v400 = vxor.u32 %v399, 2147483648
  %v401 = vmul.f32 %v400, 1.442695
  %v402 = vpow.pop %v401
  %v403 = vadd.f32 %v402, 1.0
  %v404 = vrcp.pop %v403
  %v405 = vmul.f32 1.0, %v404
  %407 = vrot.lane.b32.xlu0 %v399, 32
  %v408 = vpop.permute.xlu0 %407
  %v410 = vmul.f32 %v405, %v408
  %412 = vrot.lane.b32.xlu0 %v410, 64
  %v413 = vpop.permute.xlu0 %412
  %v415 = vadd.f32 %v399, %v413
  %v416 = vtanh.pop %v415
  %v417 = vsub.f32 1.0, %v405
  %419 = vrot.lane.b32.xlu0 %v416, 96
  %v420 = vpop.permute.xlu0 %419
  %v422 = vmul.f32 %v417, %v420
  %v423 = vmul.f32 %v405, %v322
  %v424 = vadd.f32 %v422, %v423
  %v425 = vsel %vm213, %v318, 0
  %427 = vmatprep.subr.mxu0 0.0
  %428 = vmatpush1.msra.mxu0 %v184
  %429 = vmatprep.subr.mxu0 0.0
  %430 = vmatpush1.msra.mxu0 %v185
  %431 = vmatprep.subr.mxu0 0.0
  %432 = vmatpush1.msra.mxu0 %v186
  %433 = vmatprep.subr.mxu0 0.0
  %434 = vmatpush1.msra.mxu0 %v187
  %435 = vmatprep.subr.mxu0 0.0
  %436 = vmatpush1.msra.mxu0 0.0
  %437 = vmatprep.subr.mxu0 0.0
  %438 = vmatpush1.msra.mxu0 0.0
  %439 = vmatprep.subr.mxu0 0.0
  %440 = vmatpush1.msra.mxu0 0.0
  %441 = vmatprep.subr.mxu0 0.0
  %442 = vmatpush1.msra.mxu0 0.0
  %443 = vmatprep.subr.mxu0 0.0
  %444 = vmatpush1.msra.mxu0 0.0
  %445 = vmatprep.subr.mxu0 0.0
  %446 = vmatpush1.msra.mxu0 0.0
  %447 = vmatprep.subr.mxu0 0.0
  %448 = vmatpush1.msra.mxu0 0.0
  %449 = vmatprep.subr.mxu0 0.0
  %450 = vmatpush1.msra.mxu0 0.0
  %451 = vmatprep.subr.mxu0 0.0
  %452 = vmatpush1.msra.mxu0 0.0
  %453 = vmatprep.subr.mxu0 0.0
  %454 = vmatpush1.msra.mxu0 0.0
  %455 = vmatprep.subr.mxu0 0.0
  %456 = vmatpush1.msra.mxu0 0.0
  %457 = vmatprep.subr.mxu0 0.0
  %458 = vmatpush1.msra.mxu0 0.0
  %459 = vmatprep.subr.mxu0 0.0
  %460 = vmatpush1.msra.mxu0 0.0
  %461 = vmatprep.subr.mxu0 0.0
  %462 = vmatpush1.msra.mxu0 0.0
  %463 = vmatprep.subr.mxu0 0.0
  %464 = vmatpush1.msra.mxu0 0.0
  %465 = vmatprep.subr.mxu0 0.0
  %466 = vmatpush1.msra.mxu0 0.0
  %467 = vmatprep.subr.mxu0 0.0
  %468 = vmatpush1.msra.mxu0 0.0
  %469 = vmatprep.subr.mxu0 0.0
  %470 = vmatpush1.msra.mxu0 0.0
  %471 = vmatprep.subr.mxu0 0.0
  %472 = vmatpush1.msra.mxu0 0.0
  %473 = vmatprep.subr.mxu0 0.0
  %474 = vmatpush1.msra.mxu0 0.0
  %475 = vmatprep.subr.mxu0 0.0
  %476 = vmatpush1.msra.mxu0 0.0
  %477 = vmatprep.subr.mxu0 0.0
  %478 = vmatpush1.msra.mxu0 0.0
  %479 = vmatprep.subr.mxu0 0.0
  %480 = vmatpush1.msra.mxu0 0.0
  %481 = vmatprep.subr.mxu0 0.0
  %482 = vmatpush1.msra.mxu0 0.0
  %483 = vmatprep.subr.mxu0 0.0
  %484 = vmatpush1.msra.mxu0 0.0
  %485 = vmatprep.subr.mxu0 0.0
  %486 = vmatpush1.msra.mxu0 0.0
  %487 = vmatprep.subr.mxu0 0.0
  %488 = vmatpush1.msra.mxu0 0.0
  %489 = vmatprep.subr.mxu0 0.0
  %490 = vmatpush1.msra.mxu0 0.0
  %491 = vmatprep.mubr.f32.mxu0 0.0
  %492 = vmatmul.mubr.f32.gmra.mrb[0].mxu0 %v425
  %v493 = vpop.f32.mrb[0].mxu0
  %v494 = vadd.f32 %v202, %v493
  %v495 = vpop.f32.mrb[0].mxu0
  %496 = vdwg.mxu0
  %v497 = vadd.f32 %v151, %v494
  %v498 = vxor.u32 %v497, 2147483648
  %v499 = vmul.f32 %v498, 1.442695
  %v500 = vpow.pop %v499
  %v501 = vadd.f32 %v500, 1.0
  %v502 = vrcp.pop %v501
  %v503 = vmul.f32 1.0, %v502
  %505 = vrot.lane.b32.xlu0 %v494, 64
  %v506 = vpop.permute.xlu0 %505
  %v508 = vmul.f32 %v503, %v506
  %510 = vrot.lane.b32.xlu0 %v508, 64
  %v511 = vpop.permute.xlu0 %510
  %v513 = vadd.f32 %v151, %v511
  %v514 = vtanh.pop %v513
  %v515 = vsub.f32 1.0, %v503
  %517 = vrot.lane.b32.xlu0 %v514, 96
  %v518 = vpop.permute.xlu0 %517
  %v520 = vmul.f32 %v515, %v518
  %v521 = vmul.f32 %v503, %v315
  %v522 = vadd.f32 %v520, %v521
  %524 = vrot.lane.b32.xlu0 %v522, 96
  %v525 = vpop.permute.xlu0 %524
  %v527 = vsel %vm213, %v525, %v424
  %v529 = vsel %vm325, %v527, 0
  %531 = vmatprep.subr.mxu0 0.0
  %532 = vmatpush1.msra.mxu0 %v188
  %533 = vmatprep.subr.mxu0 0.0
  %534 = vmatpush1.msra.mxu0 %v189
  %535 = vmatprep.subr.mxu0 0.0
  %536 = vmatpush1.msra.mxu0 %v190
  %537 = vmatprep.subr.mxu0 0.0
  %538 = vmatpush1.msra.mxu0 %v191
  %539 = vmatprep.subr.mxu0 0.0
  %540 = vmatpush1.msra.mxu0 %v192
  %541 = vmatprep.subr.mxu0 0.0
  %542 = vmatpush1.msra.mxu0 %v193
  %543 = vmatprep.subr.mxu0 0.0
  %544 = vmatpush1.msra.mxu0 %v194
  %545 = vmatprep.subr.mxu0 0.0
  %546 = vmatpush1.msra.mxu0 %v195
  %547 = vmatprep.subr.mxu0 0.0
  %548 = vmatpush1.msra.mxu0 0.0
  %549 = vmatprep.subr.mxu0 0.0
  %550 = vmatpush1.msra.mxu0 0.0
  %551 = vmatprep.subr.mxu0 0.0
  %552 = vmatpush1.msra.mxu0 0.0
  %553 = vmatprep.subr.mxu0 0.0
  %554 = vmatpush1.msra.mxu0 0.0
  %555 = vmatprep.subr.mxu0 0.0
  %556 = vmatpush1.msra.mxu0 0.0
  %557 = vmatprep.subr.mxu0 0.0
  %558 = vmatpush1.msra.mxu0 0.0
  %559 = vmatprep.subr.mxu0 0.0
  %560 = vmatpush1.msra.mxu0 0.0
  %561 = vmatprep.subr.mxu0 0.0
  %562 = vmatpush1.msra.mxu0 0.0
  %563 = vmatprep.subr.mxu0 0.0
  %564 = vmatpush1.msra.mxu0 0.0
  %565 = vmatprep.subr.mxu0 0.0
  %566 = vmatpush1.msra.mxu0 0.0
  %567 = vmatprep.subr.mxu0 0.0
  %568 = vmatpush1.msra.mxu0 0.0
  %569 = vmatprep.subr.mxu0 0.0
  %570 = vmatpush1.msra.mxu0 0.0
  %571 = vmatprep.subr.mxu0 0.0
  %572 = vmatpush1.msra.mxu0 0.0
  %573 = vmatprep.subr.mxu0 0.0
  %574 = vmatpush1.msra.mxu0 0.0
  %575 = vmatprep.subr.mxu0 0.0
  %576 = vmatpush1.msra.mxu0 0.0
  %577 = vmatprep.subr.mxu0 0.0
  %578 = vmatpush1.msra.mxu0 0.0
  %579 = vmatprep.subr.mxu0 0.0
  %580 = vmatpush1.msra.mxu0 0.0
  %581 = vmatprep.subr.mxu0 0.0
  %582 = vmatpush1.msra.mxu0 0.0
  %583 = vmatprep.subr.mxu0 0.0
  %584 = vmatpush1.msra.mxu0 0.0
  %585 = vmatprep.subr.mxu0 0.0
  %586 = vmatpush1.msra.mxu0 0.0
  %587 = vmatprep.subr.mxu0 0.0
  %588 = vmatpush1.msra.mxu0 0.0
  %589 = vmatprep.subr.mxu0 0.0
  %590 = vmatpush1.msra.mxu0 0.0
  %591 = vmatprep.subr.mxu0 0.0
  %592 = vmatpush1.msra.mxu0 0.0
  %593 = vmatprep.subr.mxu0 0.0
  %594 = vmatpush1.msra.mxu0 0.0
  %595 = vmatprep.mubr.f32.mxu0 0.0
  %596 = vmatmul.mubr.f32.gmra.mrb[0].mxu0 %v529
  %v597 = vpop.f32.mrb[0].mxu0
  %v598 = vadd.f32 0.0, %v597
  %v599 = vpop.f32.mrb[0].mxu0
  %600 = vdwg.mxu0
  %v601 = vadd.f32 %v598, %v208
  %v602 = vxor.u32 %v601, 2147483648
  %v603 = vmul.f32 %v602, 1.442695
  %v604 = vpow.pop %v603
  %v605 = vadd.f32 %v604, 1.0
  %v606 = vrcp.pop %v605
  %v607 = vmul.f32 1.0, %v606
  %609 = vrot.lane.b32.xlu0 %v601, 32
  %v610 = vpop.permute.xlu0 %609
  %v612 = vmul.f32 %v607, %v610
  %614 = vrot.lane.b32.xlu0 %v612, 64
  %v615 = vpop.permute.xlu0 %614
  %v617 = vadd.f32 %v601, %v615
  %v618 = vtanh.pop %v617
  %v619 = vsub.f32 1.0, %v607
  %621 = vrot.lane.b32.xlu0 %v618, 96
  %v622 = vpop.permute.xlu0 %621
  %v624 = vmul.f32 %v619, %v622
  %v625 = vmul.f32 %v607, %v424
  %v626 = vadd.f32 %v624, %v625
  %v627 = vsel %vm213, %v525, 0
  %629 = vmatprep.subr.mxu0 0.0
  %630 = vmatpush1.msra.mxu0 %v184
  %631 = vmatprep.subr.mxu0 0.0
  %632 = vmatpush1.msra.mxu0 %v185
  %633 = vmatprep.subr.mxu0 0.0
  %634 = vmatpush1.msra.mxu0 %v186
  %635 = vmatprep.subr.mxu0 0.0
  %636 = vmatpush1.msra.mxu0 %v187
  %637 = vmatprep.subr.mxu0 0.0
  %638 = vmatpush1.msra.mxu0 0.0
  %639 = vmatprep.subr.mxu0 0.0
  %640 = vmatpush1.msra.mxu0 0.0
  %641 = vmatprep.subr.mxu0 0.0
  %642 = vmatpush1.msra.mxu0 0.0
  %643 = vmatprep.subr.mxu0 0.0
  %644 = vmatpush1.msra.mxu0 0.0
  %645 = vmatprep.subr.mxu0 0.0
  %646 = vmatpush1.msra.mxu0 0.0
  %647 = vmatprep.subr.mxu0 0.0
  %648 = vmatpush1.msra.mxu0 0.0
  %649 = vmatprep.subr.mxu0 0.0
  %650 = vmatpush1.msra.mxu0 0.0
  %651 = vmatprep.subr.mxu0 0.0
  %652 = vmatpush1.msra.mxu0 0.0
  %653 = vmatprep.subr.mxu0 0.0
  %654 = vmatpush1.msra.mxu0 0.0
  %655 = vmatprep.subr.mxu0 0.0
  %656 = vmatpush1.msra.mxu0 0.0
  %657 = vmatprep.subr.mxu0 0.0
  %658 = vmatpush1.msra.mxu0 0.0
  %659 = vmatprep.subr.mxu0 0.0
  %660 = vmatpush1.msra.mxu0 0.0
  %661 = vmatprep.subr.mxu0 0.0
  %662 = vmatpush1.msra.mxu0 0.0
  %663 = vmatprep.subr.mxu0 0.0
  %664 = vmatpush1.msra.mxu0 0.0
  %665 = vmatprep.subr.mxu0 0.0
  %666 = vmatpush1.msra.mxu0 0.0
  %667 = vmatprep.subr.mxu0 0.0
  %668 = vmatpush1.msra.mxu0 0.0
  %669 = vmatprep.subr.mxu0 0.0
  %670 = vmatpush1.msra.mxu0 0.0
  %671 = vmatprep.subr.mxu0 0.0
  %672 = vmatpush1.msra.mxu0 0.0
  %673 = vmatprep.subr.mxu0 0.0
  %674 = vmatpush1.msra.mxu0 0.0
  %675 = vmatprep.subr.mxu0 0.0
  %676 = vmatpush1.msra.mxu0 0.0
  %677 = vmatprep.subr.mxu0 0.0
  %678 = vmatpush1.msra.mxu0 0.0
  %679 = vmatprep.subr.mxu0 0.0
  %680 = vmatpush1.msra.mxu0 0.0
  %681 = vmatprep.subr.mxu0 0.0
  %682 = vmatpush1.msra.mxu0 0.0
  %683 = vmatprep.subr.mxu0 0.0
  %684 = vmatpush1.msra.mxu0 0.0
  %685 = vmatprep.subr.mxu0 0.0
  %686 = vmatpush1.msra.mxu0 0.0
  %687 = vmatprep.subr.mxu0 0.0
  %688 = vmatpush1.msra.mxu0 0.0
  %689 = vmatprep.subr.mxu0 0.0
  %690 = vmatpush1.msra.mxu0 0.0
  %691 = vmatprep.subr.mxu0 0.0
  %692 = vmatpush1.msra.mxu0 0.0
  %693 = vmatprep.mubr.f32.mxu0 0.0
  %694 = vmatmul.mubr.f32.gmra.mrb[0].mxu0 %v627
  %v695 = vpop.f32.mrb[0].mxu0
  %v696 = vadd.f32 %v202, %v695
  %v697 = vpop.f32.mrb[0].mxu0
  %698 = vdwg.mxu0
  %v699 = vadd.f32 %v156, %v696
  %v700 = vxor.u32 %v699, 2147483648
  %v701 = vmul.f32 %v700, 1.442695
  %v702 = vpow.pop %v701
  %v703 = vadd.f32 %v702, 1.0
  %v704 = vrcp.pop %v703
  %v705 = vmul.f32 1.0, %v704
  %707 = vrot.lane.b32.xlu0 %v696, 64
  %v708 = vpop.permute.xlu0 %707
  %v710 = vmul.f32 %v705, %v708
  %712 = vrot.lane.b32.xlu0 %v710, 64
  %v713 = vpop.permute.xlu0 %712
  %v715 = vadd.f32 %v156, %v713
  %v716 = vtanh.pop %v715
  %v717 = vsub.f32 1.0, %v705
  %719 = vrot.lane.b32.xlu0 %v716, 96
  %v720 = vpop.permute.xlu0 %719
  %v722 = vmul.f32 %v717, %v720
  %v723 = vmul.f32 %v705, %v522
  %v724 = vadd.f32 %v722, %v723
  %726 = vrot.lane.b32.xlu0 %v724, 96
  %v727 = vpop.permute.xlu0 %726
  %v729 = vsel %vm213, %v727, %v626
  %v731 = vsel %vm325, %v729, 0
  %733 = vmatprep.subr.mxu0 0.0
  %734 = vmatpush1.msra.mxu0 %v188
  %735 = vmatprep.subr.mxu0 0.0
  %736 = vmatpush1.msra.mxu0 %v189
  %737 = vmatprep.subr.mxu0 0.0
  %738 = vmatpush1.msra.mxu0 %v190
  %739 = vmatprep.subr.mxu0 0.0
  %740 = vmatpush1.msra.mxu0 %v191
  %741 = vmatprep.subr.mxu0 0.0
  %742 = vmatpush1.msra.mxu0 %v192
  %743 = vmatprep.subr.mxu0 0.0
  %744 = vmatpush1.msra.mxu0 %v193
  %745 = vmatprep.subr.mxu0 0.0
  %746 = vmatpush1.msra.mxu0 %v194
  %747 = vmatprep.subr.mxu0 0.0
  %748 = vmatpush1.msra.mxu0 %v195
  %749 = vmatprep.subr.mxu0 0.0
  %750 = vmatpush1.msra.mxu0 0.0
  %751 = vmatprep.subr.mxu0 0.0
  %752 = vmatpush1.msra.mxu0 0.0
  %753 = vmatprep.subr.mxu0 0.0
  %754 = vmatpush1.msra.mxu0 0.0
  %755 = vmatprep.subr.mxu0 0.0
  %756 = vmatpush1.msra.mxu0 0.0
  %757 = vmatprep.subr.mxu0 0.0
  %758 = vmatpush1.msra.mxu0 0.0
  %759 = vmatprep.subr.mxu0 0.0
  %760 = vmatpush1.msra.mxu0 0.0
  %761 = vmatprep.subr.mxu0 0.0
  %762 = vmatpush1.msra.mxu0 0.0
  %763 = vmatprep.subr.mxu0 0.0
  %764 = vmatpush1.msra.mxu0 0.0
  %765 = vmatprep.subr.mxu0 0.0
  %766 = vmatpush1.msra.mxu0 0.0
  %767 = vmatprep.subr.mxu0 0.0
  %768 = vmatpush1.msra.mxu0 0.0
  %769 = vmatprep.subr.mxu0 0.0
  %770 = vmatpush1.msra.mxu0 0.0
  %771 = vmatprep.subr.mxu0 0.0
  %772 = vmatpush1.msra.mxu0 0.0
  %773 = vmatprep.subr.mxu0 0.0
  %774 = vmatpush1.msra.mxu0 0.0
  %775 = vmatprep.subr.mxu0 0.0
  %776 = vmatpush1.msra.mxu0 0.0
  %777 = vmatprep.subr.mxu0 0.0
  %778 = vmatpush1.msra.mxu0 0.0
  %779 = vmatprep.subr.mxu0 0.0
  %780 = vmatpush1.msra.mxu0 0.0
  %781 = vmatprep.subr.mxu0 0.0
  %782 = vmatpush1.msra.mxu0 0.0
  %783 = vmatprep.subr.mxu0 0.0
  %784 = vmatpush1.msra.mxu0 0.0
  %785 = vmatprep.subr.mxu0 0.0
  %786 = vmatpush1.msra.mxu0 0.0
  %787 = vmatprep.subr.mxu0 0.0
  %788 = vmatpush1.msra.mxu0 0.0
  %789 = vmatprep.subr.mxu0 0.0
  %790 = vmatpush1.msra.mxu0 0.0
  %791 = vmatprep.subr.mxu0 0.0
  %792 = vmatpush1.msra.mxu0 0.0
  %793 = vmatprep.subr.mxu0 0.0
  %794 = vmatpush1.msra.mxu0 0.0
  %795 = vmatprep.subr.mxu0 0.0
  %796 = vmatpush1.msra.mxu0 0.0
  %797 = vmatprep.mubr.f32.mxu0 0.0
  %798 = vmatmul.mubr.f32.gmra.mrb[0].mxu0 %v731
  %v799 = vpop.f32.mrb[0].mxu0
  %v800 = vadd.f32 0.0, %v799
  %v801 = vpop.f32.mrb[0].mxu0
  %802 = vdwg.mxu0
  %v803 = vadd.f32 %v800, %v208
  %v804 = vxor.u32 %v803, 2147483648
  %v805 = vmul.f32 %v804, 1.442695
  %v806 = vpow.pop %v805
  %v807 = vadd.f32 %v806, 1.0
  %v808 = vrcp.pop %v807
  %v809 = vmul.f32 1.0, %v808
  %811 = vrot.lane.b32.xlu0 %v803, 32
  %v812 = vpop.permute.xlu0 %811
  %v814 = vmul.f32 %v809, %v812
  %816 = vrot.lane.b32.xlu0 %v814, 64
  %v817 = vpop.permute.xlu0 %816
  %v819 = vadd.f32 %v803, %v817
  %v820 = vtanh.pop %v819
  %v821 = vsub.f32 1.0, %v809
  %823 = vrot.lane.b32.xlu0 %v820, 96
  %v824 = vpop.permute.xlu0 %823
  %v826 = vmul.f32 %v821, %v824
  %v827 = vmul.f32 %v809, %v626
  %v828 = vadd.f32 %v826, %v827
  %v829 = vsel %vm213, %v727, 0
  %831 = vmatprep.subr.mxu0 0.0
  %832 = vmatpush1.msra.mxu0 %v184
  %833 = vmatprep.subr.mxu0 0.0
  %834 = vmatpush1.msra.mxu0 %v185
  %835 = vmatprep.subr.mxu0 0.0
  %836 = vmatpush1.msra.mxu0 %v186
  %837 = vmatprep.subr.mxu0 0.0
  %838 = vmatpush1.msra.mxu0 %v187
  %839 = vmatprep.subr.mxu0 0.0
  %840 = vmatpush1.msra.mxu0 0.0
  %841 = vmatprep.subr.mxu0 0.0
  %842 = vmatpush1.msra.mxu0 0.0
  %843 = vmatprep.subr.mxu0 0.0
  %844 = vmatpush1.msra.mxu0 0.0
  %845 = vmatprep.subr.mxu0 0.0
  %846 = vmatpush1.msra.mxu0 0.0
  %847 = vmatprep.subr.mxu0 0.0
  %848 = vmatpush1.msra.mxu0 0.0
  %849 = vmatprep.subr.mxu0 0.0
  %850 = vmatpush1.msra.mxu0 0.0
  %851 = vmatprep.subr.mxu0 0.0
  %852 = vmatpush1.msra.mxu0 0.0
  %853 = vmatprep.subr.mxu0 0.0
  %854 = vmatpush1.msra.mxu0 0.0
  %855 = vmatprep.subr.mxu0 0.0
  %856 = vmatpush1.msra.mxu0 0.0
  %857 = vmatprep.subr.mxu0 0.0
  %858 = vmatpush1.msra.mxu0 0.0
  %859 = vmatprep.subr.mxu0 0.0
  %860 = vmatpush1.msra.mxu0 0.0
  %861 = vmatprep.subr.mxu0 0.0
  %862 = vmatpush1.msra.mxu0 0.0
  %863 = vmatprep.subr.mxu0 0.0
  %864 = vmatpush1.msra.mxu0 0.0
  %865 = vmatprep.subr.mxu0 0.0
  %866 = vmatpush1.msra.mxu0 0.0
  %867 = vmatprep.subr.mxu0 0.0
  %868 = vmatpush1.msra.mxu0 0.0
  %869 = vmatprep.subr.mxu0 0.0
  %870 = vmatpush1.msra.mxu0 0.0
  %871 = vmatprep.subr.mxu0 0.0
  %872 = vmatpush1.msra.mxu0 0.0
  %873 = vmatprep.subr.mxu0 0.0
  %874 = vmatpush1.msra.mxu0 0.0
  %875 = vmatprep.subr.mxu0 0.0
  %876 = vmatpush1.msra.mxu0 0.0
  %877 = vmatprep.subr.mxu0 0.0
  %878 = vmatpush1.msra.mxu0 0.0
  %879 = vmatprep.subr.mxu0 0.0
  %880 = vmatpush1.msra.mxu0 0.0
  %881 = vmatprep.subr.mxu0 0.0
  %882 = vmatpush1.msra.mxu0 0.0
  %883 = vmatprep.subr.mxu0 0.0
  %884 = vmatpush1.msra.mxu0 0.0
  %885 = vmatprep.subr.mxu0 0.0
  %886 = vmatpush1.msra.mxu0 0.0
  %887 = vmatprep.subr.mxu0 0.0
  %888 = vmatpush1.msra.mxu0 0.0
  %889 = vmatprep.subr.mxu0 0.0
  %890 = vmatpush1.msra.mxu0 0.0
  %891 = vmatprep.subr.mxu0 0.0
  %892 = vmatpush1.msra.mxu0 0.0
  %893 = vmatprep.subr.mxu0 0.0
  %894 = vmatpush1.msra.mxu0 0.0
  %895 = vmatprep.mubr.f32.mxu0 0.0
  %896 = vmatmul.mubr.f32.gmra.mrb[0].mxu0 %v829
  %v897 = vpop.f32.mrb[0].mxu0
  %v898 = vadd.f32 %v202, %v897
  %v899 = vpop.f32.mrb[0].mxu0
  %900 = vdwg.mxu0
  %v901 = vadd.f32 %v161, %v898
  %v902 = vxor.u32 %v901, 2147483648
  %v903 = vmul.f32 %v902, 1.442695
  %v904 = vpow.pop %v903
  %v905 = vadd.f32 %v904, 1.0
  %v906 = vrcp.pop %v905
  %v907 = vmul.f32 1.0, %v906
  %909 = vrot.lane.b32.xlu0 %v898, 64
  %v910 = vpop.permute.xlu0 %909
  %v912 = vmul.f32 %v907, %v910
  %914 = vrot.lane.b32.xlu0 %v912, 64
  %v915 = vpop.permute.xlu0 %914
  %v917 = vadd.f32 %v161, %v915
  %v918 = vtanh.pop %v917
  %v919 = vsub.f32 1.0, %v907
  %921 = vrot.lane.b32.xlu0 %v918, 96
  %v922 = vpop.permute.xlu0 %921
  %v924 = vmul.f32 %v919, %v922
  %v925 = vmul.f32 %v907, %v724
  %v926 = vadd.f32 %v924, %v925
  %928 = vrot.lane.b32.xlu0 %v926, 96
  %v929 = vpop.permute.xlu0 %928
  %v931 = vsel %vm213, %v929, %v828
  %v933 = vsel %vm325, %v931, 0
  %935 = vmatprep.subr.mxu0 0.0
  %936 = vmatpush1.msra.mxu0 %v188
  %937 = vmatprep.subr.mxu0 0.0
  %938 = vmatpush1.msra.mxu0 %v189
  %939 = vmatprep.subr.mxu0 0.0
  %940 = vmatpush1.msra.mxu0 %v190
  %941 = vmatprep.subr.mxu0 0.0
  %942 = vmatpush1.msra.mxu0 %v191
  %943 = vmatprep.subr.mxu0 0.0
  %944 = vmatpush1.msra.mxu0 %v192
  %945 = vmatprep.subr.mxu0 0.0
  %946 = vmatpush1.msra.mxu0 %v193
  %947 = vmatprep.subr.mxu0 0.0
  %948 = vmatpush1.msra.mxu0 %v194
  %949 = vmatprep.subr.mxu0 0.0
  %950 = vmatpush1.msra.mxu0 %v195
  %951 = vmatprep.subr.mxu0 0.0
  %952 = vmatpush1.msra.mxu0 0.0
  %953 = vmatprep.subr.mxu0 0.0
  %954 = vmatpush1.msra.mxu0 0.0
  %955 = vmatprep.subr.mxu0 0.0
  %956 = vmatpush1.msra.mxu0 0.0
  %957 = vmatprep.subr.mxu0 0.0
  %958 = vmatpush1.msra.mxu0 0.0
  %959 = vmatprep.subr.mxu0 0.0
  %960 = vmatpush1.msra.mxu0 0.0
  %961 = vmatprep.subr.mxu0 0.0
  %962 = vmatpush1.msra.mxu0 0.0
  %963 = vmatprep.subr.mxu0 0.0
  %964 = vmatpush1.msra.mxu0 0.0
  %965 = vmatprep.subr.mxu0 0.0
  %966 = vmatpush1.msra.mxu0 0.0
  %967 = vmatprep.subr.mxu0 0.0
  %968 = vmatpush1.msra.mxu0 0.0
  %969 = vmatprep.subr.mxu0 0.0
  %970 = vmatpush1.msra.mxu0 0.0
  %971 = vmatprep.subr.mxu0 0.0
  %972 = vmatpush1.msra.mxu0 0.0
  %973 = vmatprep.subr.mxu0 0.0
  %974 = vmatpush1.msra.mxu0 0.0
  %975 = vmatprep.subr.mxu0 0.0
  %976 = vmatpush1.msra.mxu0 0.0
  %977 = vmatprep.subr.mxu0 0.0
  %978 = vmatpush1.msra.mxu0 0.0
  %979 = vmatprep.subr.mxu0 0.0
  %980 = vmatpush1.msra.mxu0 0.0
  %981 = vmatprep.subr.mxu0 0.0
  %982 = vmatpush1.msra.mxu0 0.0
  %983 = vmatprep.subr.mxu0 0.0
  %984 = vmatpush1.msra.mxu0 0.0
  %985 = vmatprep.subr.mxu0 0.0
  %986 = vmatpush1.msra.mxu0 0.0
  %987 = vmatprep.subr.mxu0 0.0
  %988 = vmatpush1.msra.mxu0 0.0
  %989 = vmatprep.subr.mxu0 0.0
  %990 = vmatpush1.msra.mxu0 0.0
  %991 = vmatprep.subr.mxu0 0.0
  %992 = vmatpush1.msra.mxu0 0.0
  %993 = vmatprep.subr.mxu0 0.0
  %994 = vmatpush1.msra.mxu0 0.0
  %995 = vmatprep.subr.mxu0 0.0
  %996 = vmatpush1.msra.mxu0 0.0
  %997 = vmatprep.subr.mxu0 0.0
  %998 = vmatpush1.msra.mxu0 0.0
  %999 = vmatprep.mubr.f32.mxu0 0.0
  %1000 = vmatmul.mubr.f32.gmra.mrb[0].mxu0 %v933
  %v1001 = vpop.f32.mrb[0].mxu0
  %v1002 = vadd.f32 0.0, %v1001
  %v1003 = vpop.f32.mrb[0].mxu0
  %1004 = vdwg.mxu0
  %v1005 = vadd.f32 %v1002, %v208
  %v1006 = vxor.u32 %v1005, 2147483648
  %v1007 = vmul.f32 %v1006, 1.442695
  %v1008 = vpow.pop %v1007
  %v1009 = vadd.f32 %v1008, 1.0
  %v1010 = vrcp.pop %v1009
  %v1011 = vmul.f32 1.0, %v1010
  %1013 = vrot.lane.b32.xlu0 %v1005, 32
  %v1014 = vpop.permute.xlu0 %1013
  %v1016 = vmul.f32 %v1011, %v1014
  %1018 = vrot.lane.b32.xlu0 %v1016, 64
  %v1019 = vpop.permute.xlu0 %1018
  %v1021 = vadd.f32 %v1005, %v1019
  %v1022 = vtanh.pop %v1021
  %v1023 = vsub.f32 1.0, %v1011
  %1025 = vrot.lane.b32.xlu0 %v1022, 96
  %v1026 = vpop.permute.xlu0 %1025
  %v1028 = vmul.f32 %v1023, %v1026
  %v1029 = vmul.f32 %v1011, %v828
  %v1030 = vadd.f32 %v1028, %v1029
  %v1031 = vsel %vm213, %v929, 0
  %1033 = vmatprep.subr.mxu0 0.0
  %1034 = vmatpush1.msra.mxu0 %v184
  %1035 = vmatprep.subr.mxu0 0.0
  %1036 = vmatpush1.msra.mxu0 %v185
  %1037 = vmatprep.subr.mxu0 0.0
  %1038 = vmatpush1.msra.mxu0 %v186
  %1039 = vmatprep.subr.mxu0 0.0
  %1040 = vmatpush1.msra.mxu0 %v187
  %1041 = vmatprep.subr.mxu0 0.0
  %1042 = vmatpush1.msra.mxu0 0.0
  %1043 = vmatprep.subr.mxu0 0.0
  %1044 = vmatpush1.msra.mxu0 0.0
  %1045 = vmatprep.subr.mxu0 0.0
  %1046 = vmatpush1.msra.mxu0 0.0
  %1047 = vmatprep.subr.mxu0 0.0
  %1048 = vmatpush1.msra.mxu0 0.0
  %1049 = vmatprep.subr.mxu0 0.0
  %1050 = vmatpush1.msra.mxu0 0.0
  %1051 = vmatprep.subr.mxu0 0.0
  %1052 = vmatpush1.msra.mxu0 0.0
  %1053 = vmatprep.subr.mxu0 0.0
  %1054 = vmatpush1.msra.mxu0 0.0
  %1055 = vmatprep.subr.mxu0 0.0
  %1056 = vmatpush1.msra.mxu0 0.0
  %1057 = vmatprep.subr.mxu0 0.0
  %1058 = vmatpush1.msra.mxu0 0.0
  %1059 = vmatprep.subr.mxu0 0.0
  %1060 = vmatpush1.msra.mxu0 0.0
  %1061 = vmatprep.subr.mxu0 0.0
  %1062 = vmatpush1.msra.mxu0 0.0
  %1063 = vmatprep.subr.mxu0 0.0
  %1064 = vmatpush1.msra.mxu0 0.0
  %1065 = vmatprep.subr.mxu0 0.0
  %1066 = vmatpush1.msra.mxu0 0.0
  %1067 = vmatprep.subr.mxu0 0.0
  %1068 = vmatpush1.msra.mxu0 0.0
  %1069 = vmatprep.subr.mxu0 0.0
  %1070 = vmatpush1.msra.mxu0 0.0
  %1071 = vmatprep.subr.mxu0 0.0
  %1072 = vmatpush1.msra.mxu0 0.0
  %1073 = vmatprep.subr.mxu0 0.0
  %1074 = vmatpush1.msra.mxu0 0.0
  %1075 = vmatprep.subr.mxu0 0.0
  %1076 = vmatpush1.msra.mxu0 0.0
  %1077 = vmatprep.subr.mxu0 0.0
  %1078 = vmatpush1.msra.mxu0 0.0
  %1079 = vmatprep.subr.mxu0 0.0
  %1080 = vmatpush1.msra.mxu0 0.0
  %1081 = vmatprep.subr.mxu0 0.0
  %1082 = vmatpush1.msra.mxu0 0.0
  %1083 = vmatprep.subr.mxu0 0.0
  %1084 = vmatpush1.msra.mxu0 0.0
  %1085 = vmatprep.subr.mxu0 0.0
  %1086 = vmatpush1.msra.mxu0 0.0
  %1087 = vmatprep.subr.mxu0 0.0
  %1088 = vmatpush1.msra.mxu0 0.0
  %1089 = vmatprep.subr.mxu0 0.0
  %1090 = vmatpush1.msra.mxu0 0.0
  %1091 = vmatprep.subr.mxu0 0.0
  %1092 = vmatpush1.msra.mxu0 0.0
  %1093 = vmatprep.subr.mxu0 0.0
  %1094 = vmatpush1.msra.mxu0 0.0
  %1095 = vmatprep.subr.mxu0 0.0
  %1096 = vmatpush1.msra.mxu0 0.0
  %1097 = vmatprep.mubr.f32.mxu0 0.0
  %1098 = vmatmul.mubr.f32.gmra.mrb[0].mxu0 %v1031
  %v1099 = vpop.f32.mrb[0].mxu0
  %v1100 = vadd.f32 %v202, %v1099
  %v1101 = vpop.f32.mrb[0].mxu0
  %1102 = vdwg.mxu0
  %v1103 = vadd.f32 %v166, %v1100
  %v1104 = vxor.u32 %v1103, 2147483648
  %v1105 = vmul.f32 %v1104, 1.442695
  %v1106 = vpow.pop %v1105
  %v1107 = vadd.f32 %v1106, 1.0
  %v1108 = vrcp.pop %v1107
  %v1109 = vmul.f32 1.0, %v1108
  %1111 = vrot.lane.b32.xlu0 %v1100, 64
  %v1112 = vpop.permute.xlu0 %1111
  %v1114 = vmul.f32 %v1109, %v1112
  %1116 = vrot.lane.b32.xlu0 %v1114, 64
  %v1117 = vpop.permute.xlu0 %1116
  %v1119 = vadd.f32 %v166, %v1117
  %v1120 = vtanh.pop %v1119
  %v1121 = vsub.f32 1.0, %v1109
  %1123 = vrot.lane.b32.xlu0 %v1120, 96
  %v1124 = vpop.permute.xlu0 %1123
  %v1126 = vmul.f32 %v1121, %v1124
  %v1127 = vmul.f32 %v1109, %v926
  %v1128 = vadd.f32 %v1126, %v1127
  %1130 = vrot.lane.b32.xlu0 %v1128, 96
  %v1131 = vpop.permute.xlu0 %1130
  %v1133 = vsel %vm213, %v1131, %v1030
  %v1135 = vsel %vm325, %v1133, 0
  %1137 = vmatprep.subr.mxu0 0.0
  %1138 = vmatpush1.msra.mxu0 %v188
  %1139 = vmatprep.subr.mxu0 0.0
  %1140 = vmatpush1.msra.mxu0 %v189
  %1141 = vmatprep.subr.mxu0 0.0
  %1142 = vmatpush1.msra.mxu0 %v190
  %1143 = vmatprep.subr.mxu0 0.0
  %1144 = vmatpush1.msra.mxu0 %v191
  %1145 = vmatprep.subr.mxu0 0.0
  %1146 = vmatpush1.msra.mxu0 %v192
  %1147 = vmatprep.subr.mxu0 0.0
  %1148 = vmatpush1.msra.mxu0 %v193
  %1149 = vmatprep.subr.mxu0 0.0
  %1150 = vmatpush1.msra.mxu0 %v194
  %1151 = vmatprep.subr.mxu0 0.0
  %1152 = vmatpush1.msra.mxu0 %v195
  %1153 = vmatprep.subr.mxu0 0.0
  %1154 = vmatpush1.msra.mxu0 0.0
  %1155 = vmatprep.subr.mxu0 0.0
  %1156 = vmatpush1.msra.mxu0 0.0
  %1157 = vmatprep.subr.mxu0 0.0
  %1158 = vmatpush1.msra.mxu0 0.0
  %1159 = vmatprep.subr.mxu0 0.0
  %1160 = vmatpush1.msra.mxu0 0.0
  %1161 = vmatprep.subr.mxu0 0.0
  %1162 = vmatpush1.msra.mxu0 0.0
  %1163 = vmatprep.subr.mxu0 0.0
  %1164 = vmatpush1.msra.mxu0 0.0
  %1165 = vmatprep.subr.mxu0 0.0
  %1166 = vmatpush1.msra.mxu0 0.0
  %1167 = vmatprep.subr.mxu0 0.0
  %1168 = vmatpush1.msra.mxu0 0.0
  %1169 = vmatprep.subr.mxu0 0.0
  %1170 = vmatpush1.msra.mxu0 0.0
  %1171 = vmatprep.subr.mxu0 0.0
  %1172 = vmatpush1.msra.mxu0 0.0
  %1173 = vmatprep.subr.mxu0 0.0
  %1174 = vmatpush1.msra.mxu0 0.0
  %1175 = vmatprep.subr.mxu0 0.0
  %1176 = vmatpush1.msra.mxu0 0.0
  %1177 = vmatprep.subr.mxu0 0.0
  %1178 = vmatpush1.msra.mxu0 0.0
  %1179 = vmatprep.subr.mxu0 0.0
  %1180 = vmatpush1.msra.mxu0 0.0
  %1181 = vmatprep.subr.mxu0 0.0
  %1182 = vmatpush1.msra.mxu0 0.0
  %1183 = vmatprep.subr.mxu0 0.0
  %1184 = vmatpush1.msra.mxu0 0.0
  %1185 = vmatprep.subr.mxu0 0.0
  %1186 = vmatpush1.msra.mxu0 0.0
  %1187 = vmatprep.subr.mxu0 0.0
  %1188 = vmatpush1.msra.mxu0 0.0
  %1189 = vmatprep.subr.mxu0 0.0
  %1190 = vmatpush1.msra.mxu0 0.0
  %1191 = vmatprep.subr.mxu0 0.0
  %1192 = vmatpush1.msra.mxu0 0.0
  %1193 = vmatprep.subr.mxu0 0.0
  %1194 = vmatpush1.msra.mxu0 0.0
  %1195 = vmatprep.subr.mxu0 0.0
  %1196 = vmatpush1.msra.mxu0 0.0
  %1197 = vmatprep.subr.mxu0 0.0
  %1198 = vmatpush1.msra.mxu0 0.0
  %1199 = vmatprep.subr.mxu0 0.0
  %1200 = vmatpush1.msra.mxu0 0.0
  %1201 = vmatprep.mubr.f32.mxu0 0.0
  %1202 = vmatmul.mubr.f32.gmra.mrb[0].mxu0 %v1135
  %v1203 = vpop.f32.mrb[0].mxu0
  %v1204 = vadd.f32 0.0, %v1203
  %v1205 = vpop.f32.mrb[0].mxu0
  %1206 = vdwg.mxu0
  %v1207 = vadd.f32 %v1204, %v208
  %v1208 = vxor.u32 %v1207, 2147483648
  %v1209 = vmul.f32 %v1208, 1.442695
  %v1210 = vpow.pop %v1209
  %v1211 = vadd.f32 %v1210, 1.0
  %v1212 = vrcp.pop %v1211
  %v1213 = vmul.f32 1.0, %v1212
  %1215 = vrot.lane.b32.xlu0 %v1207, 32
  %v1216 = vpop.permute.xlu0 %1215
  %v1218 = vmul.f32 %v1213, %v1216
  %1220 = vrot.lane.b32.xlu0 %v1218, 64
  %v1221 = vpop.permute.xlu0 %1220
  %v1223 = vadd.f32 %v1207, %v1221
  %v1224 = vtanh.pop %v1223
  %v1225 = vsub.f32 1.0, %v1213
  %1227 = vrot.lane.b32.xlu0 %v1224, 96
  %v1228 = vpop.permute.xlu0 %1227
  %v1230 = vmul.f32 %v1225, %v1228
  %v1231 = vmul.f32 %v1213, %v1030
  %v1232 = vadd.f32 %v1230, %v1231
  %v1233 = vsel %vm213, %v1131, 0
  %1235 = vmatprep.subr.mxu0 0.0
  %1236 = vmatpush1.msra.mxu0 %v184
  %1237 = vmatprep.subr.mxu0 0.0
  %1238 = vmatpush1.msra.mxu0 %v185
  %1239 = vmatprep.subr.mxu0 0.0
  %1240 = vmatpush1.msra.mxu0 %v186
  %1241 = vmatprep.subr.mxu0 0.0
  %1242 = vmatpush1.msra.mxu0 %v187
  %1243 = vmatprep.subr.mxu0 0.0
  %1244 = vmatpush1.msra.mxu0 0.0
  %1245 = vmatprep.subr.mxu0 0.0
  %1246 = vmatpush1.msra.mxu0 0.0
  %1247 = vmatprep.subr.mxu0 0.0
  %1248 = vmatpush1.msra.mxu0 0.0
  %1249 = vmatprep.subr.mxu0 0.0
  %1250 = vmatpush1.msra.mxu0 0.0
  %1251 = vmatprep.subr.mxu0 0.0
  %1252 = vmatpush1.msra.mxu0 0.0
  %1253 = vmatprep.subr.mxu0 0.0
  %1254 = vmatpush1.msra.mxu0 0.0
  %1255 = vmatprep.subr.mxu0 0.0
  %1256 = vmatpush1.msra.mxu0 0.0
  %1257 = vmatprep.subr.mxu0 0.0
  %1258 = vmatpush1.msra.mxu0 0.0
  %1259 = vmatprep.subr.mxu0 0.0
  %1260 = vmatpush1.msra.mxu0 0.0
  %1261 = vmatprep.subr.mxu0 0.0
  %1262 = vmatpush1.msra.mxu0 0.0
  %1263 = vmatprep.subr.mxu0 0.0
  %1264 = vmatpush1.msra.mxu0 0.0
  %1265 = vmatprep.subr.mxu0 0.0
  %1266 = vmatpush1.msra.mxu0 0.0
  %1267 = vmatprep.subr.mxu0 0.0
  %1268 = vmatpush1.msra.mxu0 0.0
  %1269 = vmatprep.subr.mxu0 0.0
  %1270 = vmatpush1.msra.mxu0 0.0
  %1271 = vmatprep.subr.mxu0 0.0
  %1272 = vmatpush1.msra.mxu0 0.0
  %1273 = vmatprep.subr.mxu0 0.0
  %1274 = vmatpush1.msra.mxu0 0.0
  %1275 = vmatprep.subr.mxu0 0.0
  %1276 = vmatpush1.msra.mxu0 0.0
  %1277 = vmatprep.subr.mxu0 0.0
  %1278 = vmatpush1.msra.mxu0 0.0
  %1279 = vmatprep.subr.mxu0 0.0
  %1280 = vmatpush1.msra.mxu0 0.0
  %1281 = vmatprep.subr.mxu0 0.0
  %1282 = vmatpush1.msra.mxu0 0.0
  %1283 = vmatprep.subr.mxu0 0.0
  %1284 = vmatpush1.msra.mxu0 0.0
  %1285 = vmatprep.subr.mxu0 0.0
  %1286 = vmatpush1.msra.mxu0 0.0
  %1287 = vmatprep.subr.mxu0 0.0
  %1288 = vmatpush1.msra.mxu0 0.0
  %1289 = vmatprep.subr.mxu0 0.0
  %1290 = vmatpush1.msra.mxu0 0.0
  %1291 = vmatprep.subr.mxu0 0.0
  %1292 = vmatpush1.msra.mxu0 0.0
  %1293 = vmatprep.subr.mxu0 0.0
  %1294 = vmatpush1.msra.mxu0 0.0
  %1295 = vmatprep.subr.mxu0 0.0
  %1296 = vmatpush1.msra.mxu0 0.0
  %1297 = vmatprep.subr.mxu0 0.0
  %1298 = vmatpush1.msra.mxu0 0.0
  %1299 = vmatprep.mubr.f32.mxu0 0.0
  %1300 = vmatmul.mubr.f32.gmra.mrb[0].mxu0 %v1233
  %v1301 = vpop.f32.mrb[0].mxu0
  %v1302 = vadd.f32 %v202, %v1301
  %v1303 = vpop.f32.mrb[0].mxu0
  %1304 = vdwg.mxu0
  %v1305 = vadd.f32 %v171, %v1302
  %v1306 = vxor.u32 %v1305, 2147483648
  %v1307 = vmul.f32 %v1306, 1.442695
  %v1308 = vpow.pop %v1307
  %v1309 = vadd.f32 %v1308, 1.0
  %v1310 = vrcp.pop %v1309
  %v1311 = vmul.f32 1.0, %v1310
  %1313 = vrot.lane.b32.xlu0 %v1302, 64
  %v1314 = vpop.permute.xlu0 %1313
  %v1316 = vmul.f32 %v1311, %v1314
  %1318 = vrot.lane.b32.xlu0 %v1316, 64
  %v1319 = vpop.permute.xlu0 %1318
  %v1321 = vadd.f32 %v171, %v1319
  %v1322 = vtanh.pop %v1321
  %v1323 = vsub.f32 1.0, %v1311
  %1325 = vrot.lane.b32.xlu0 %v1322, 96
  %v1326 = vpop.permute.xlu0 %1325
  %v1328 = vmul.f32 %v1323, %v1326
  %v1329 = vmul.f32 %v1311, %v1128
  %v1330 = vadd.f32 %v1328, %v1329
  %1332 = vrot.lane.b32.xlu0 %v1330, 96
  %v1333 = vpop.permute.xlu0 %1332
  %v1335 = vsel %vm213, %v1333, %v1232
  %v1337 = vsel %vm325, %v1335, 0
  %1339 = vmatprep.subr.mxu0 0.0
  %1340 = vmatpush1.msra.mxu0 %v188
  %1341 = vmatprep.subr.mxu0 0.0
  %1342 = vmatpush1.msra.mxu0 %v189
  %1343 = vmatprep.subr.mxu0 0.0
  %1344 = vmatpush1.msra.mxu0 %v190
  %1345 = vmatprep.subr.mxu0 0.0
  %1346 = vmatpush1.msra.mxu0 %v191
  %1347 = vmatprep.subr.mxu0 0.0
  %1348 = vmatpush1.msra.mxu0 %v192
  %1349 = vmatprep.subr.mxu0 0.0
  %1350 = vmatpush1.msra.mxu0 %v193
  %1351 = vmatprep.subr.mxu0 0.0
  %1352 = vmatpush1.msra.mxu0 %v194
  %1353 = vmatprep.subr.mxu0 0.0
  %1354 = vmatpush1.msra.mxu0 %v195
  %1355 = vmatprep.subr.mxu0 0.0
  %1356 = vmatpush1.msra.mxu0 0.0
  %1357 = vmatprep.subr.mxu0 0.0
  %1358 = vmatpush1.msra.mxu0 0.0
  %1359 = vmatprep.subr.mxu0 0.0
  %1360 = vmatpush1.msra.mxu0 0.0
  %1361 = vmatprep.subr.mxu0 0.0
  %1362 = vmatpush1.msra.mxu0 0.0
  %1363 = vmatprep.subr.mxu0 0.0
  %1364 = vmatpush1.msra.mxu0 0.0
  %1365 = vmatprep.subr.mxu0 0.0
  %1366 = vmatpush1.msra.mxu0 0.0
  %1367 = vmatprep.subr.mxu0 0.0
  %1368 = vmatpush1.msra.mxu0 0.0
  %1369 = vmatprep.subr.mxu0 0.0
  %1370 = vmatpush1.msra.mxu0 0.0
  %1371 = vmatprep.subr.mxu0 0.0
  %1372 = vmatpush1.msra.mxu0 0.0
  %1373 = vmatprep.subr.mxu0 0.0
  %1374 = vmatpush1.msra.mxu0 0.0
  %1375 = vmatprep.subr.mxu0 0.0
  %1376 = vmatpush1.msra.mxu0 0.0
  %1377 = vmatprep.subr.mxu0 0.0
  %1378 = vmatpush1.msra.mxu0 0.0
  %1379 = vmatprep.subr.mxu0 0.0
  %1380 = vmatpush1.msra.mxu0 0.0
  %1381 = vmatprep.subr.mxu0 0.0
  %1382 = vmatpush1.msra.mxu0 0.0
  %1383 = vmatprep.subr.mxu0 0.0
  %1384 = vmatpush1.msra.mxu0 0.0
  %1385 = vmatprep.subr.mxu0 0.0
  %1386 = vmatpush1.msra.mxu0 0.0
  %1387 = vmatprep.subr.mxu0 0.0
  %1388 = vmatpush1.msra.mxu0 0.0
  %1389 = vmatprep.subr.mxu0 0.0
  %1390 = vmatpush1.msra.mxu0 0.0
  %1391 = vmatprep.subr.mxu0 0.0
  %1392 = vmatpush1.msra.mxu0 0.0
  %1393 = vmatprep.subr.mxu0 0.0
  %1394 = vmatpush1.msra.mxu0 0.0
  %1395 = vmatprep.subr.mxu0 0.0
  %1396 = vmatpush1.msra.mxu0 0.0
  %1397 = vmatprep.subr.mxu0 0.0
  %1398 = vmatpush1.msra.mxu0 0.0
  %1399 = vmatprep.subr.mxu0 0.0
  %1400 = vmatpush1.msra.mxu0 0.0
  %1401 = vmatprep.subr.mxu0 0.0
  %1402 = vmatpush1.msra.mxu0 0.0
  %1403 = vmatprep.mubr.f32.mxu0 0.0
  %1404 = vmatmul.mubr.f32.gmra.mrb[0].mxu0 %v1337
  %v1405 = vpop.f32.mrb[0].mxu0
  %v1406 = vadd.f32 0.0, %v1405
  %v1407 = vpop.f32.mrb[0].mxu0
  %1408 = vdwg.mxu0
  %v1409 = vadd.f32 %v1406, %v208
  %v1410 = vxor.u32 %v1409, 2147483648
  %v1411 = vmul.f32 %v1410, 1.442695
  %v1412 = vpow.pop %v1411
  %v1413 = vadd.f32 %v1412, 1.0
  %v1414 = vrcp.pop %v1413
  %v1415 = vmul.f32 1.0, %v1414
  %1417 = vrot.lane.b32.xlu0 %v1409, 32
  %v1418 = vpop.permute.xlu0 %1417
  %v1420 = vmul.f32 %v1415, %v1418
  %1422 = vrot.lane.b32.xlu0 %v1420, 64
  %v1423 = vpop.permute.xlu0 %1422
  %v1425 = vadd.f32 %v1409, %v1423
  %v1426 = vtanh.pop %v1425
  %v1427 = vsub.f32 1.0, %v1415
  %1429 = vrot.lane.b32.xlu0 %v1426, 96
  %v1430 = vpop.permute.xlu0 %1429
  %v1432 = vmul.f32 %v1427, %v1430
  %v1433 = vmul.f32 %v1415, %v1232
  %v1434 = vadd.f32 %v1432, %v1433
  %v1435 = vsel %vm213, %v1333, 0
  %1437 = vmatprep.subr.mxu0 0.0
  %1438 = vmatpush1.msra.mxu0 %v184
  %1439 = vmatprep.subr.mxu0 0.0
  %1440 = vmatpush1.msra.mxu0 %v185
  %1441 = vmatprep.subr.mxu0 0.0
  %1442 = vmatpush1.msra.mxu0 %v186
  %1443 = vmatprep.subr.mxu0 0.0
  %1444 = vmatpush1.msra.mxu0 %v187
  %1445 = vmatprep.subr.mxu0 0.0
  %1446 = vmatpush1.msra.mxu0 0.0
  %1447 = vmatprep.subr.mxu0 0.0
  %1448 = vmatpush1.msra.mxu0 0.0
  %1449 = vmatprep.subr.mxu0 0.0
  %1450 = vmatpush1.msra.mxu0 0.0
  %1451 = vmatprep.subr.mxu0 0.0
  %1452 = vmatpush1.msra.mxu0 0.0
  %1453 = vmatprep.subr.mxu0 0.0
  %1454 = vmatpush1.msra.mxu0 0.0
  %1455 = vmatprep.subr.mxu0 0.0
  %1456 = vmatpush1.msra.mxu0 0.0
  %1457 = vmatprep.subr.mxu0 0.0
  %1458 = vmatpush1.msra.mxu0 0.0
  %1459 = vmatprep.subr.mxu0 0.0
  %1460 = vmatpush1.msra.mxu0 0.0
  %1461 = vmatprep.subr.mxu0 0.0
  %1462 = vmatpush1.msra.mxu0 0.0
  %1463 = vmatprep.subr.mxu0 0.0
  %1464 = vmatpush1.msra.mxu0 0.0
  %1465 = vmatprep.subr.mxu0 0.0
  %1466 = vmatpush1.msra.mxu0 0.0
  %1467 = vmatprep.subr.mxu0 0.0
  %1468 = vmatpush1.msra.mxu0 0.0
  %1469 = vmatprep.subr.mxu0 0.0
  %1470 = vmatpush1.msra.mxu0 0.0
  %1471 = vmatprep.subr.mxu0 0.0
  %1472 = vmatpush1.msra.mxu0 0.0
  %1473 = vmatprep.subr.mxu0 0.0
  %1474 = vmatpush1.msra.mxu0 0.0
  %1475 = vmatprep.subr.mxu0 0.0
  %1476 = vmatpush1.msra.mxu0 0.0
  %1477 = vmatprep.subr.mxu0 0.0
  %1478 = vmatpush1.msra.mxu0 0.0
  %1479 = vmatprep.subr.mxu0 0.0
  %1480 = vmatpush1.msra.mxu0 0.0
  %1481 = vmatprep.subr.mxu0 0.0
  %1482 = vmatpush1.msra.mxu0 0.0
  %1483 = vmatprep.subr.mxu0 0.0
  %1484 = vmatpush1.msra.mxu0 0.0
  %1485 = vmatprep.subr.mxu0 0.0
  %1486 = vmatpush1.msra.mxu0 0.0
  %1487 = vmatprep.subr.mxu0 0.0
  %1488 = vmatpush1.msra.mxu0 0.0
  %1489 = vmatprep.subr.mxu0 0.0
  %1490 = vmatpush1.msra.mxu0 0.0
  %1491 = vmatprep.subr.mxu0 0.0
  %1492 = vmatpush1.msra.mxu0 0.0
  %1493 = vmatprep.subr.mxu0 0.0
  %1494 = vmatpush1.msra.mxu0 0.0
  %1495 = vmatprep.subr.mxu0 0.0
  %1496 = vmatpush1.msra.mxu0 0.0
  %1497 = vmatprep.subr.mxu0 0.0
  %1498 = vmatpush1.msra.mxu0 0.0
  %1499 = vmatprep.subr.mxu0 0.0
  %1500 = vmatpush1.msra.mxu0 0.0
  %1501 = vmatprep.mubr.f32.mxu0 0.0
  %1502 = vmatmul.mubr.f32.gmra.mrb[0].mxu0 %v1435
  %v1503 = vpop.f32.mrb[0].mxu0
  %v1504 = vadd.f32 %v202, %v1503
  %v1505 = vpop.f32.mrb[0].mxu0
  %1506 = vdwg.mxu0
  %v1507 = vadd.f32 %v176, %v1504
  %v1508 = vxor.u32 %v1507, 2147483648
  %v1509 = vmul.f32 %v1508, 1.442695
  %v1510 = vpow.pop %v1509
  %v1511 = vadd.f32 %v1510, 1.0
  %v1512 = vrcp.pop %v1511
  %v1513 = vmul.f32 1.0, %v1512
  %1515 = vrot.lane.b32.xlu0 %v1504, 64
  %v1516 = vpop.permute.xlu0 %1515
  %v1518 = vmul.f32 %v1513, %v1516
  %1520 = vrot.lane.b32.xlu0 %v1518, 64
  %v1521 = vpop.permute.xlu0 %1520
  %v1523 = vadd.f32 %v176, %v1521
  %v1524 = vtanh.pop %v1523
  %v1525 = vsub.f32 1.0, %v1513
  %1527 = vrot.lane.b32.xlu0 %v1524, 96
  %v1528 = vpop.permute.xlu0 %1527
  %v1530 = vmul.f32 %v1525, %v1528
  %v1531 = vmul.f32 %v1513, %v1330
  %v1532 = vadd.f32 %v1530, %v1531
  %1534 = vrot.lane.b32.xlu0 %v1532, 96
  %v1535 = vpop.permute.xlu0 %1534
  %v1537 = vsel %vm213, %v1535, %v1434
  %v1539 = vsel %vm325, %v1537, 0
  %1541 = vmatprep.subr.mxu0 0.0
  %1542 = vmatpush1.msra.mxu0 %v188
  %1543 = vmatprep.subr.mxu0 0.0
  %1544 = vmatpush1.msra.mxu0 %v189
  %1545 = vmatprep.subr.mxu0 0.0
  %1546 = vmatpush1.msra.mxu0 %v190
  %1547 = vmatprep.subr.mxu0 0.0
  %1548 = vmatpush1.msra.mxu0 %v191
  %1549 = vmatprep.subr.mxu0 0.0
  %1550 = vmatpush1.msra.mxu0 %v192
  %1551 = vmatprep.subr.mxu0 0.0
  %1552 = vmatpush1.msra.mxu0 %v193
  %1553 = vmatprep.subr.mxu0 0.0
  %1554 = vmatpush1.msra.mxu0 %v194
  %1555 = vmatprep.subr.mxu0 0.0
  %1556 = vmatpush1.msra.mxu0 %v195
  %1557 = vmatprep.subr.mxu0 0.0
  %1558 = vmatpush1.msra.mxu0 0.0
  %1559 = vmatprep.subr.mxu0 0.0
  %1560 = vmatpush1.msra.mxu0 0.0
  %1561 = vmatprep.subr.mxu0 0.0
  %1562 = vmatpush1.msra.mxu0 0.0
  %1563 = vmatprep.subr.mxu0 0.0
  %1564 = vmatpush1.msra.mxu0 0.0
  %1565 = vmatprep.subr.mxu0 0.0
  %1566 = vmatpush1.msra.mxu0 0.0
  %1567 = vmatprep.subr.mxu0 0.0
  %1568 = vmatpush1.msra.mxu0 0.0
  %1569 = vmatprep.subr.mxu0 0.0
  %1570 = vmatpush1.msra.mxu0 0.0
  %1571 = vmatprep.subr.mxu0 0.0
  %1572 = vmatpush1.msra.mxu0 0.0
  %1573 = vmatprep.subr.mxu0 0.0
  %1574 = vmatpush1.msra.mxu0 0.0
  %1575 = vmatprep.subr.mxu0 0.0
  %1576 = vmatpush1.msra.mxu0 0.0
  %1577 = vmatprep.subr.mxu0 0.0
  %1578 = vmatpush1.msra.mxu0 0.0
  %1579 = vmatprep.subr.mxu0 0.0
  %1580 = vmatpush1.msra.mxu0 0.0
  %1581 = vmatprep.subr.mxu0 0.0
  %1582 = vmatpush1.msra.mxu0 0.0
  %1583 = vmatprep.subr.mxu0 0.0
  %1584 = vmatpush1.msra.mxu0 0.0
  %1585 = vmatprep.subr.mxu0 0.0
  %1586 = vmatpush1.msra.mxu0 0.0
  %1587 = vmatprep.subr.mxu0 0.0
  %1588 = vmatpush1.msra.mxu0 0.0
  %1589 = vmatprep.subr.mxu0 0.0
  %1590 = vmatpush1.msra.mxu0 0.0
  %1591 = vmatprep.subr.mxu0 0.0
  %1592 = vmatpush1.msra.mxu0 0.0
  %1593 = vmatprep.subr.mxu0 0.0
  %1594 = vmatpush1.msra.mxu0 0.0
  %1595 = vmatprep.subr.mxu0 0.0
  %1596 = vmatpush1.msra.mxu0 0.0
  %1597 = vmatprep.subr.mxu0 0.0
  %1598 = vmatpush1.msra.mxu0 0.0
  %1599 = vmatprep.subr.mxu0 0.0
  %1600 = vmatpush1.msra.mxu0 0.0
  %1601 = vmatprep.subr.mxu0 0.0
  %1602 = vmatpush1.msra.mxu0 0.0
  %1603 = vmatprep.subr.mxu0 0.0
  %1604 = vmatpush1.msra.mxu0 0.0
  %1605 = vmatprep.mubr.f32.mxu0 0.0
  %1606 = vmatmul.mubr.f32.gmra.mrb[0].mxu0 %v1539
  %v1607 = vpop.f32.mrb[0].mxu0
  %v1608 = vadd.f32 0.0, %v1607
  %v1609 = vpop.f32.mrb[0].mxu0
  %1610 = vdwg.mxu0
  %v1611 = vadd.f32 %v1608, %v208
  %v1612 = vxor.u32 %v1611, 2147483648
  %v1613 = vmul.f32 %v1612, 1.442695
  %v1614 = vpow.pop %v1613
  %v1615 = vadd.f32 %v1614, 1.0
  %v1616 = vrcp.pop %v1615
  %v1617 = vmul.f32 1.0, %v1616
  %1619 = vrot.lane.b32.xlu0 %v1611, 32
  %v1620 = vpop.permute.xlu0 %1619
  %v1622 = vmul.f32 %v1617, %v1620
  %1624 = vrot.lane.b32.xlu0 %v1622, 64
  %v1625 = vpop.permute.xlu0 %1624
  %v1627 = vadd.f32 %v1611, %v1625
  %v1628 = vtanh.pop %v1627
  %v1629 = vsub.f32 1.0, %v1617
  %1631 = vrot.lane.b32.xlu0 %v1628, 96
  %v1632 = vpop.permute.xlu0 %1631
  %v1634 = vmul.f32 %v1629, %v1632
  %v1635 = vmul.f32 %v1617, %v1434
  %v1636 = vadd.f32 %v1634, %v1635
  %v1637 = vsel %vm213, %v1535, 0
  %1639 = vmatprep.subr.mxu0 0.0
  %1640 = vmatpush1.msra.mxu0 %v184
  %1641 = vmatprep.subr.mxu0 0.0
  %1642 = vmatpush1.msra.mxu0 %v185
  %1643 = vmatprep.subr.mxu0 0.0
  %1644 = vmatpush1.msra.mxu0 %v186
  %1645 = vmatprep.subr.mxu0 0.0
  %1646 = vmatpush1.msra.mxu0 %v187
  %1647 = vmatprep.subr.mxu0 0.0
  %1648 = vmatpush1.msra.mxu0 0.0
  %1649 = vmatprep.subr.mxu0 0.0
  %1650 = vmatpush1.msra.mxu0 0.0
  %1651 = vmatprep.subr.mxu0 0.0
  %1652 = vmatpush1.msra.mxu0 0.0
  %1653 = vmatprep.subr.mxu0 0.0
  %1654 = vmatpush1.msra.mxu0 0.0
  %1655 = vmatprep.subr.mxu0 0.0
  %1656 = vmatpush1.msra.mxu0 0.0
  %1657 = vmatprep.subr.mxu0 0.0
  %1658 = vmatpush1.msra.mxu0 0.0
  %1659 = vmatprep.subr.mxu0 0.0
  %1660 = vmatpush1.msra.mxu0 0.0
  %1661 = vmatprep.subr.mxu0 0.0
  %1662 = vmatpush1.msra.mxu0 0.0
  %1663 = vmatprep.subr.mxu0 0.0
  %1664 = vmatpush1.msra.mxu0 0.0
  %1665 = vmatprep.subr.mxu0 0.0
  %1666 = vmatpush1.msra.mxu0 0.0
  %1667 = vmatprep.subr.mxu0 0.0
  %1668 = vmatpush1.msra.mxu0 0.0
  %1669 = vmatprep.subr.mxu0 0.0
  %1670 = vmatpush1.msra.mxu0 0.0
  %1671 = vmatprep.subr.mxu0 0.0
  %1672 = vmatpush1.msra.mxu0 0.0
  %1673 = vmatprep.subr.mxu0 0.0
  %1674 = vmatpush1.msra.mxu0 0.0
  %1675 = vmatprep.subr.mxu0 0.0
  %1676 = vmatpush1.msra.mxu0 0.0
  %1677 = vmatprep.subr.mxu0 0.0
  %1678 = vmatpush1.msra.mxu0 0.0
  %1679 = vmatprep.subr.mxu0 0.0
  %1680 = vmatpush1.msra.mxu0 0.0
  %1681 = vmatprep.subr.mxu0 0.0
  %1682 = vmatpush1.msra.mxu0 0.0
  %1683 = vmatprep.subr.mxu0 0.0
  %1684 = vmatpush1.msra.mxu0 0.0
  %1685 = vmatprep.subr.mxu0 0.0
  %1686 = vmatpush1.msra.mxu0 0.0
  %1687 = vmatprep.subr.mxu0 0.0
  %1688 = vmatpush1.msra.mxu0 0.0
  %1689 = vmatprep.subr.mxu0 0.0
  %1690 = vmatpush1.msra.mxu0 0.0
  %1691 = vmatprep.subr.mxu0 0.0
  %1692 = vmatpush1.msra.mxu0 0.0
  %1693 = vmatprep.subr.mxu0 0.0
  %1694 = vmatpush1.msra.mxu0 0.0
  %1695 = vmatprep.subr.mxu0 0.0
  %1696 = vmatpush1.msra.mxu0 0.0
  %1697 = vmatprep.subr.mxu0 0.0
  %1698 = vmatpush1.msra.mxu0 0.0
  %1699 = vmatprep.subr.mxu0 0.0
  %1700 = vmatpush1.msra.mxu0 0.0
  %1701 = vmatprep.subr.mxu0 0.0
  %1702 = vmatpush1.msra.mxu0 0.0
  %1703 = vmatprep.mubr.f32.mxu0 0.0
  %1704 = vmatmul.mubr.f32.gmra.mrb[0].mxu0 %v1637
  %v1705 = vpop.f32.mrb[0].mxu0
  %v1706 = vadd.f32 %v202, %v1705
  %v1707 = vpop.f32.mrb[0].mxu0
  %1708 = vdwg.mxu0
  %v1709 = vadd.f32 %v181, %v1706
  %v1710 = vxor.u32 %v1709, 2147483648
  %v1711 = vmul.f32 %v1710, 1.442695
  %v1712 = vpow.pop %v1711
  %v1713 = vadd.f32 %v1712, 1.0
  %v1714 = vrcp.pop %v1713
  %v1715 = vmul.f32 1.0, %v1714
  %1717 = vrot.lane.b32.xlu0 %v1706, 64
  %v1718 = vpop.permute.xlu0 %1717
  %v1720 = vmul.f32 %v1715, %v1718
  %1722 = vrot.lane.b32.xlu0 %v1720, 64
  %v1723 = vpop.permute.xlu0 %1722
  %v1725 = vadd.f32 %v181, %v1723
  %v1726 = vtanh.pop %v1725
  %v1727 = vsub.f32 1.0, %v1715
  %1729 = vrot.lane.b32.xlu0 %v1726, 96
  %v1730 = vpop.permute.xlu0 %1729
  %v1732 = vmul.f32 %v1727, %v1730
  %v1733 = vmul.f32 %v1715, %v1532
  %v1734 = vadd.f32 %v1732, %v1733
  %1736 = vrot.lane.b32.xlu0 %v1734, 96
  %v1737 = vpop.permute.xlu0 %1736
  %v1739 = vsel %vm213, %v1737, %v1636
  %v1741 = vsel %vm325, %v1739, 0
  %1743 = vmatprep.subr.mxu0 0.0
  %1744 = vmatpush1.msra.mxu0 %v188
  %1745 = vmatprep.subr.mxu0 0.0
  %1746 = vmatpush1.msra.mxu0 %v189
  %1747 = vmatprep.subr.mxu0 0.0
  %1748 = vmatpush1.msra.mxu0 %v190
  %1749 = vmatprep.subr.mxu0 0.0
  %1750 = vmatpush1.msra.mxu0 %v191
  %1751 = vmatprep.subr.mxu0 0.0
  %1752 = vmatpush1.msra.mxu0 %v192
  %1753 = vmatprep.subr.mxu0 0.0
  %1754 = vmatpush1.msra.mxu0 %v193
  %1755 = vmatprep.subr.mxu0 0.0
  %1756 = vmatpush1.msra.mxu0 %v194
  %1757 = vmatprep.subr.mxu0 0.0
  %1758 = vmatpush1.msra.mxu0 %v195
  %1759 = vmatprep.subr.mxu0 0.0
  %1760 = vmatpush1.msra.mxu0 0.0
  %1761 = vmatprep.subr.mxu0 0.0
  %1762 = vmatpush1.msra.mxu0 0.0
  %1763 = vmatprep.subr.mxu0 0.0
  %1764 = vmatpush1.msra.mxu0 0.0
  %1765 = vmatprep.subr.mxu0 0.0
  %1766 = vmatpush1.msra.mxu0 0.0
  %1767 = vmatprep.subr.mxu0 0.0
  %1768 = vmatpush1.msra.mxu0 0.0
  %1769 = vmatprep.subr.mxu0 0.0
  %1770 = vmatpush1.msra.mxu0 0.0
  %1771 = vmatprep.subr.mxu0 0.0
  %1772 = vmatpush1.msra.mxu0 0.0
  %1773 = vmatprep.subr.mxu0 0.0
  %1774 = vmatpush1.msra.mxu0 0.0
  %1775 = vmatprep.subr.mxu0 0.0
  %1776 = vmatpush1.msra.mxu0 0.0
  %1777 = vmatprep.subr.mxu0 0.0
  %1778 = vmatpush1.msra.mxu0 0.0
  %1779 = vmatprep.subr.mxu0 0.0
  %1780 = vmatpush1.msra.mxu0 0.0
  %1781 = vmatprep.subr.mxu0 0.0
  %1782 = vmatpush1.msra.mxu0 0.0
  %1783 = vmatprep.subr.mxu0 0.0
  %1784 = vmatpush1.msra.mxu0 0.0
  %1785 = vmatprep.subr.mxu0 0.0
  %1786 = vmatpush1.msra.mxu0 0.0
  %1787 = vmatprep.subr.mxu0 0.0
  %1788 = vmatpush1.msra.mxu0 0.0
  %1789 = vmatprep.subr.mxu0 0.0
  %1790 = vmatpush1.msra.mxu0 0.0
  %1791 = vmatprep.subr.mxu0 0.0
  %1792 = vmatpush1.msra.mxu0 0.0
  %1793 = vmatprep.subr.mxu0 0.0
  %1794 = vmatpush1.msra.mxu0 0.0
  %1795 = vmatprep.subr.mxu0 0.0
  %1796 = vmatpush1.msra.mxu0 0.0
  %1797 = vmatprep.subr.mxu0 0.0
  %1798 = vmatpush1.msra.mxu0 0.0
  %1799 = vmatprep.subr.mxu0 0.0
  %1800 = vmatpush1.msra.mxu0 0.0
  %1801 = vmatprep.subr.mxu0 0.0
  %1802 = vmatpush1.msra.mxu0 0.0
  %1803 = vmatprep.subr.mxu0 0.0
  %1804 = vmatpush1.msra.mxu0 0.0
  %1805 = vmatprep.subr.mxu0 0.0
  %1806 = vmatpush1.msra.mxu0 0.0
  %1807 = vmatprep.mubr.f32.mxu0 0.0
  %1808 = vmatmul.mubr.f32.gmra.mrb[0].mxu0 %v1741
  %v1809 = vpop.f32.mrb[0].mxu0
  %v1810 = vadd.f32 0.0, %v1809
  %v1811 = vpop.f32.mrb[0].mxu0
  %1812 = vdwg.mxu0
  %v1813 = vadd.f32 %v1810, %v208
  %v1814 = vxor.u32 %v1813, 2147483648
  %v1815 = vmul.f32 %v1814, 1.442695
  %v1816 = vpow.pop %v1815
  %v1817 = vadd.f32 %v1816, 1.0
  %v1818 = vrcp.pop %v1817
  %v1819 = vmul.f32 1.0, %v1818
  %1821 = vrot.lane.b32.xlu0 %v1813, 32
  %v1822 = vpop.permute.xlu0 %1821
  %v1824 = vmul.f32 %v1819, %v1822
  %1826 = vrot.lane.b32.xlu0 %v1824, 64
  %v1827 = vpop.permute.xlu0 %1826
  %v1829 = vadd.f32 %v1813, %v1827
  %v1830 = vtanh.pop %v1829
  %v1831 = vsub.f32 1.0, %v1819
  %1833 = vrot.lane.b32.xlu0 %v1830, 96
  %v1834 = vpop.permute.xlu0 %1833
  %v1836 = vmul.f32 %v1831, %v1834
  %v1837 = vmul.f32 %v1819, %v1636
  %v1838 = vadd.f32 %v1836, %v1837
  %1839 = vst.msk [vmem:[%s11] sm:$0xff] %vm213, %v1737
  %1841 = vrot.lane.b32.xlu0 %v1838, 96
  %v1842 = vpop.permute.xlu0 %1841
  %s1844 = scalar_lea.vmem %s11, 8
  %1845 = vst.msk [vmem:[%s1844] sm:$0xff] %vm213, %v1842
  %v1846 = vld [vmem:[%s8] sm:$0xff]
  %v1847 = vld [vmem:[%s8 + $0x8] sm:$0xff]
  %v1848 = vld [vmem:[%s8 + $0x10] sm:$0xff]
  %v1849 = vld [vmem:[%s8 + $0x18] sm:$0xff]
  %v1850 = vld [vmem:[%s9] sm:$0x1]
  %v1852 = vlaneseq
  %v1853 = vshrl.u32 %v1852, 7
  %v1854 = vsub.s32 0, %v1853
  %v1855 = vrot.slane %v1850, %v1854
  %1864 = vrot.lane.b32.xlu0 %v424, 96
  %v1865 = vpop.permute.xlu0 %1864
  %1866 = vrot.lane.b32.xlu0 %v626, 96
  %v1867 = vpop.permute.xlu0 %1866
  %1868 = vrot.lane.b32.xlu0 %v828, 96
  %v1869 = vpop.permute.xlu0 %1868
  %1870 = vrot.lane.b32.xlu0 %v1030, 96
  %v1871 = vpop.permute.xlu0 %1870
  %1872 = vrot.lane.b32.xlu0 %v1232, 96
  %v1873 = vpop.permute.xlu0 %1872
  %1874 = vrot.lane.b32.xlu0 %v1434, 96
  %v1875 = vpop.permute.xlu0 %1874
  %1876 = vrot.lane.b32.xlu0 %v1636, 96
  %v1877 = vpop.permute.xlu0 %1876
  %v1878 = vsel %vm213, %v1865, 0
  %v1880 = vsel %vm213, %v1867, 0
  %v1882 = vsel %vm213, %v1869, 0
  %v1884 = vsel %vm213, %v1871, 0
  %v1886 = vsel %vm213, %v1873, 0
  %v1888 = vsel %vm213, %v1875, 0
  %v1890 = vsel %vm213, %v1877, 0
  %v1892 = vsel %vm213, %v1842, 0
  %1894 = vmatprep.subr.mxu0 0.0
  %1895 = vmatpush1.msra.mxu0 %v1846
  %1896 = vmatprep.subr.mxu0 0.0
  %1897 = vmatpush1.msra.mxu0 %v1847
  %1898 = vmatprep.subr.mxu0 0.0
  %1899 = vmatpush1.msra.mxu0 %v1848
  %1900 = vmatprep.subr.mxu0 0.0
  %1901 = vmatpush1.msra.mxu0 %v1849
  %1902 = vmatprep.subr.mxu0 0.0
  %1903 = vmatpush1.msra.mxu0 0.0
  %1904 = vmatprep.subr.mxu0 0.0
  %1905 = vmatpush1.msra.mxu0 0.0
  %1906 = vmatprep.subr.mxu0 0.0
  %1907 = vmatpush1.msra.mxu0 0.0
  %1908 = vmatprep.subr.mxu0 0.0
  %1909 = vmatpush1.msra.mxu0 0.0
  %1910 = vmatprep.subr.mxu0 0.0
  %1911 = vmatpush1.msra.mxu0 0.0
  %1912 = vmatprep.subr.mxu0 0.0
  %1913 = vmatpush1.msra.mxu0 0.0
  %1914 = vmatprep.subr.mxu0 0.0
  %1915 = vmatpush1.msra.mxu0 0.0
  %1916 = vmatprep.subr.mxu0 0.0
  %1917 = vmatpush1.msra.mxu0 0.0
  %1918 = vmatprep.subr.mxu0 0.0
  %1919 = vmatpush1.msra.mxu0 0.0
  %1920 = vmatprep.subr.mxu0 0.0
  %1921 = vmatpush1.msra.mxu0 0.0
  %1922 = vmatprep.subr.mxu0 0.0
  %1923 = vmatpush1.msra.mxu0 0.0
  %1924 = vmatprep.subr.mxu0 0.0
  %1925 = vmatpush1.msra.mxu0 0.0
  %1926 = vmatprep.subr.mxu0 0.0
  %1927 = vmatpush1.msra.mxu0 0.0
  %1928 = vmatprep.subr.mxu0 0.0
  %1929 = vmatpush1.msra.mxu0 0.0
  %1930 = vmatprep.subr.mxu0 0.0
  %1931 = vmatpush1.msra.mxu0 0.0
  %1932 = vmatprep.subr.mxu0 0.0
  %1933 = vmatpush1.msra.mxu0 0.0
  %1934 = vmatprep.subr.mxu0 0.0
  %1935 = vmatpush1.msra.mxu0 0.0
  %1936 = vmatprep.subr.mxu0 0.0
  %1937 = vmatpush1.msra.mxu0 0.0
  %1938 = vmatprep.subr.mxu0 0.0
  %1939 = vmatpush1.msra.mxu0 0.0
  %1940 = vmatprep.subr.mxu0 0.0
  %1941 = vmatpush1.msra.mxu0 0.0
  %1942 = vmatprep.subr.mxu0 0.0
  %1943 = vmatpush1.msra.mxu0 0.0
  %1944 = vmatprep.subr.mxu0 0.0
  %1945 = vmatpush1.msra.mxu0 0.0
  %1946 = vmatprep.subr.mxu0 0.0
  %1947 = vmatpush1.msra.mxu0 0.0
  %1948 = vmatprep.subr.mxu0 0.0
  %1949 = vmatpush1.msra.mxu0 0.0
  %1950 = vmatprep.subr.mxu0 0.0
  %1951 = vmatpush1.msra.mxu0 0.0
  %1952 = vmatprep.subr.mxu0 0.0
  %1953 = vmatpush1.msra.mxu0 0.0
  %1954 = vmatprep.subr.mxu0 0.0
  %1955 = vmatpush1.msra.mxu0 0.0
  %1956 = vmatprep.subr.mxu0 0.0
  %1957 = vmatpush1.msra.mxu0 0.0
  %1958 = vmatprep.mubr.f32.mxu0 0.0
  %1959 = vmatmul.mubr.f32.gmra.mrb[0].mxu0 %v1878
  %v1960 = vpop.f32.mrb[0].mxu0
  %v1961 = vadd.f32 %v1855, %v1960
  %v1962 = vpop.f32.mrb[0].mxu0
  %1963 = vmatprep.mubr.f32.mxu0 0.0
  %1964 = vmatmul.mubr.f32.gmra.mrb[0].mxu0 %v1880
  %v1965 = vpop.f32.mrb[0].mxu0
  %v1966 = vadd.f32 %v1855, %v1965
  %v1967 = vpop.f32.mrb[0].mxu0
  %1968 = vmatprep.mubr.f32.mxu0 0.0
  %1969 = vmatmul.mubr.f32.gmra.mrb[0].mxu0 %v1882
  %v1970 = vpop.f32.mrb[0].mxu0
  %v1971 = vadd.f32 %v1855, %v1970
  %v1972 = vpop.f32.mrb[0].mxu0
  %1973 = vmatprep.mubr.f32.mxu0 0.0
  %1974 = vmatmul.mubr.f32.gmra.mrb[0].mxu0 %v1884
  %v1975 = vpop.f32.mrb[0].mxu0
  %v1976 = vadd.f32 %v1855, %v1975
  %v1977 = vpop.f32.mrb[0].mxu0
  %1978 = vmatprep.mubr.f32.mxu0 0.0
  %1979 = vmatmul.mubr.f32.gmra.mrb[0].mxu0 %v1886
  %v1980 = vpop.f32.mrb[0].mxu0
  %v1981 = vadd.f32 %v1855, %v1980
  %v1982 = vpop.f32.mrb[0].mxu0
  %1983 = vmatprep.mubr.f32.mxu0 0.0
  %1984 = vmatmul.mubr.f32.gmra.mrb[0].mxu0 %v1888
  %v1985 = vpop.f32.mrb[0].mxu0
  %v1986 = vadd.f32 %v1855, %v1985
  %v1987 = vpop.f32.mrb[0].mxu0
  %1988 = vmatprep.mubr.f32.mxu0 0.0
  %1989 = vmatmul.mubr.f32.gmra.mrb[0].mxu0 %v1890
  %v1990 = vpop.f32.mrb[0].mxu0
  %v1991 = vadd.f32 %v1855, %v1990
  %v1992 = vpop.f32.mrb[0].mxu0
  %1993 = vmatprep.mubr.f32.mxu0 0.0
  %1994 = vmatmul.mubr.f32.gmra.mrb[0].mxu0 %v1892
  %v1995 = vpop.f32.mrb[0].mxu0
  %v1996 = vadd.f32 %v1855, %v1995
  %v1997 = vpop.f32.mrb[0].mxu0
  %1998 = vdwg.mxu0
  %1999 = vst.msk [vmem:[%s10] sm:$0xff] %vm54, %v1961
  %2000 = vst.msk [vmem:[%s10 + $0x8] sm:$0xff] %vm54, %v1966
  %2001 = vst.msk [vmem:[%s10 + $0x10] sm:$0xff] %vm54, %v1971
  %2002 = vst.msk [vmem:[%s10 + $0x18] sm:$0xff] %vm54, %v1976
  %2003 = vst.msk [vmem:[%s10 + $0x20] sm:$0xff] %vm54, %v1981
  %2004 = vst.msk [vmem:[%s10 + $0x28] sm:$0xff] %vm54, %v1986
  %2005 = vst.msk [vmem:[%s10 + $0x30] sm:$0xff] %vm54, %v1991
  %2006 = vst.msk [vmem:[%s10 + $0x38] sm:$0xff] %vm54, %v1996
  // Predicated region
  $region42: #{rnn_decoder_forward.1} parent=0 // pred_check
    _
  $region43: #{rnn_decoder_forward.1} parent=0 // pred_check_branch
    %2008 = sbr.rel (0) target = $region45
  $region44: #{rnn_decoder_forward.1} parent=0 // pred_region
    _
  $region45: #{rnn_decoder_forward.1} parent=0 // pred_fallthru
    _
  // Predicated region
  $region46: #{rnn_decoder_forward.1} parent=0 // pred_check
    _
  $region47: #{rnn_decoder_forward.1} parent=0 // pred_check_branch
    %2010 = sbr.rel (0) target = $region49
  $region48: #{rnn_decoder_forward.1} parent=0 // pred_region
    _
  $region49: #{rnn_decoder_forward.1} parent=0 // pred_fallthru
    _
  // Predicated region
  $region50: #{rnn_decoder_forward.1} parent=0 // pred_check
    _
  $region51: #{rnn_decoder_forward.1} parent=0 // pred_check_branch
    %2012 = sbr.rel (0) target = $region53
  $region52: #{rnn_decoder_forward.1} parent=0 // pred_region
    _
  $region53: #{rnn_decoder_forward.1} parent=0 // pred_fallthru
    _
  // Predicated region
  $region54: #{rnn_decoder_forward.1} parent=0 // pred_check
    _
  $region55: #{rnn_decoder_forward.1} parent=0 // pred_check_branch
    %2014 = sbr.rel (0) target = $region57
  $region56: #{rnn_decoder_forward.1} parent=0 // pred_region
    _
  $region57: #{rnn_decoder_forward.1} parent=0 // pred_fallthru
    _

</llo_original>
